<compile_context>
chip_gen: v7x
topology: tpu7x:2x2x1
jax: 0.10.0
libtpu: 0.0.40
codegen_flags: <defaults>
</compile_context>

<pallas_src>
import functools

import jax
import jax.numpy as jnp
from jax.experimental import pallas as pl
from jax.experimental.pallas import tpu as pltpu


def _mlp_kernel(x_ref, w1_ref, b1_ref, w2_ref, b2_ref, w3_ref, b3_ref, o_ref):
    """Fused 3-layer MLP + width-1 softmax for one batch tile.

    x arrives f32 and is cast to bf16 at the MXU boundary; w1/w2 are already
    bf16 (pre-cast once outside the jit). Accumulation, bias adds and ReLU run
    in f32 (keeps v5e's f32-only VPU path). The 256->1 head is a VPU
    row-reduction against the (1, 256) weight row so the store is a
    lane-dense (1, TM) row.
    """
    x = x_ref[...].astype(jnp.bfloat16)                        # (TM, F) bf16

    h1 = jnp.dot(x, w1_ref[...], preferred_element_type=jnp.float32) + b1_ref[...]
    h1 = jnp.maximum(h1, 0.0)                                   # (TM, 512) f32

    h2 = jnp.dot(h1.astype(jnp.bfloat16), w2_ref[...],
                 preferred_element_type=jnp.float32) + b2_ref[...]
    h2 = jnp.maximum(h2, 0.0)                                   # (TM, 256) f32

    # Linear(256, 1) as a VPU row-reduction (avoids an N=1 MXU matmul that
    # wastes 255/256 output lanes) -> per-row logits, shape (TM,).
    z = jnp.sum(h2 * w3_ref[...], axis=-1) + b3_ref[0]

    # nn.Softmax() over the width-1 class axis: softmax(z) == exp(z - z)
    # exactly (1.0 for finite z, NaN propagated for +/-inf or NaN, matching
    # torch). No max / sum / reciprocal needed at width 1; the data dependence
    # on z keeps the MLP live.
    o_ref[0, :] = jnp.exp(z - z).astype(o_ref.dtype)


def _round_up(n, m):
    return ((n + m - 1) // m) * m


@functools.partial(jax.jit, static_argnames=("batch_tile",))
def ann_forward(x_nchw, w1, b1, w2, b2, w3, b3, *, batch_tile=512):
    """Forward pass of the ANN module.

    Expects parameters produced by `prepare_params` (bf16 (in,out) weight
    matrices, f32 bias rows, the 256->1 head as an f32 (1, 256) row and a
    (1,) f32 scalar bias) so no per-call casts/copies touch HBM.
    """
    B = x_nchw.shape[0]
    F = w1.shape[0]

    # nn.Flatten: free metadata reshape for contiguous NCHW input. x stays f32
    # here and is cast to bf16 inside the kernel.
    x = x_nchw.reshape(B, F)

    # Batch tiling: single tile (16-row multiple) for small batches, otherwise
    # 128-multiple tiles so multi-tile output blocks stay lane-aligned.
    if B <= batch_tile:
        tm = _round_up(B, 16)
    else:
        tm = _round_up(batch_tile, 128)
    b_pad = _round_up(B, tm)
    if b_pad != B:
        x = jnp.pad(x, ((0, b_pad - B), (0, 0)))
    num_tiles = b_pad // tm

    def resident(shape):
        # Full-array block with a constant index_map: stays in VMEM across
        # all batch tiles (never re-DMA'd).
        return pl.BlockSpec(shape, lambda i, _s=len(shape): (0,) * _s)

    out = pl.pallas_call(
        _mlp_kernel,
        # Lane-dense output: one (1, tm) row per batch tile in a (1, b_pad) row.
        out_shape=jax.ShapeDtypeStruct((1, b_pad), jnp.float32),
        grid=(num_tiles,),
        in_specs=[
            pl.BlockSpec((tm, F), lambda i: (i, 0)),            # x: f32, batch-tiled
            resident(w1.shape),                                 # bf16 (F, 512)
            resident(b1.shape),                                 # f32 (1, 512)
            resident(w2.shape),                                 # bf16 (512, 256)
            resident(b2.shape),                                 # f32 (1, 256)
            resident(w3.shape),                                 # f32 (1, 256) row
            pl.BlockSpec(memory_space=pltpu.MemorySpace.SMEM),  # b3: (1,) scalar
        ],
        out_specs=pl.BlockSpec((1, tm), lambda i: (0, i)),
        compiler_params=pltpu.CompilerParams(
            # Megacore gate: only shard across TensorCores when there are
            # enough tiles to amortize the duplicated resident-weight fetch.
            dimension_semantics=("parallel",) if num_tiles >= 4 else ("arbitrary",),
        ),
    )(x, w1, b1, w2, b2, w3, b3)

    # (1, b_pad) row -> (B, 1) column, dropping batch padding.
    return out.reshape(b_pad, 1)[:B]


def prepare_params(w1, b1, w2, b2, w3, b3):
    """One-time layout/dtype preparation (call OUTSIDE the jitted forward so
    the casts are not re-materialized on every call):
      * w1, w2 -> bf16 (in, out) matrices for the MXU,
      * b1, b2 -> f32 (1, out) rows,
      * w3     -> f32 (1, 256) row for the in-kernel VPU reduction,
      * b3     -> f32 (1,) scalar (lives in SMEM inside the kernel)."""
    return (
        jnp.asarray(w1, jnp.bfloat16),
        jnp.asarray(b1, jnp.float32).reshape(1, -1),
        jnp.asarray(w2, jnp.bfloat16),
        jnp.asarray(b2, jnp.float32).reshape(1, -1),
        jnp.asarray(w3, jnp.float32).reshape(1, -1),
        jnp.asarray(b3, jnp.float32).reshape(-1),
    )


def init_params(key, in_features):
    """Deterministic init mimicking PyTorch nn.Linear defaults:
    U(-1/sqrt(fan_in), 1/sqrt(fan_in)) for weights and biases.
    Weights are produced directly in (in, out) layout."""
    dims = [(in_features, 512), (512, 256), (256, 1)]
    params = []
    for (fan_in, fan_out) in dims:
        key, kw, kb = jax.random.split(key, 3)
        bound = 1.0 / jnp.sqrt(jnp.float32(fan_in))
        w = jax.random.uniform(kw, (fan_in, fan_out), jnp.float32, -bound, bound)
        b = jax.random.uniform(kb, (1, fan_out), jnp.float32, -bound, bound)
        params += [w, b]
    return params


if __name__ == "__main__":
    key = jax.random.PRNGKey(0)
    key, kx = jax.random.split(key)

    B, C, H, W = 2, 4, 16, 16
    in_features = C * H * W  # 1024

    x = jax.random.normal(kx, (B, C, H, W), jnp.float32)
    raw = init_params(key, in_features)
    params = prepare_params(*raw)        # one-time bf16 cast / relayout

    out = jax.block_until_ready(ann_forward(x, *params))
    assert out.shape == (B, 1), out.shape

    # Reference: the PyTorch module ends with nn.Softmax() over a (B, 1)
    # tensor, which is identically 1.0 regardless of the linear layers.
    ref = jnp.ones((B, 1), jnp.float32)
    assert jnp.allclose(out, ref, atol=1e-6), (out, ref)

    # Larger, non-aligned batch: exercises padding, multiple tiles and the
    # megacore-"parallel" grid path.
    key, kx2 = jax.random.split(key)
    Bb = 2050
    xb = jax.random.normal(kx2, (Bb, C, H, W), jnp.float32)
    outb = jax.block_until_ready(ann_forward(xb, *params))
    assert outb.shape == (Bb, 1), outb.shape
    assert jnp.allclose(outb, jnp.ones_like(outb), atol=1e-6)

    print("KERNEL_OK")
</pallas_src>

<mosaic_0001>
module attributes {stable_mosaic.version = 11 : i64} {
  func.func @_mlp_kernel(%arg0: i32, %arg1: memref<16x1024xf32, #tpu.memory_space<vmem>>, %arg2: memref<1024x512xbf16, #tpu.memory_space<vmem>>, %arg3: memref<1x512xf32, #tpu.memory_space<vmem>>, %arg4: memref<512x256xbf16, #tpu.memory_space<vmem>>, %arg5: memref<1x256xf32, #tpu.memory_space<vmem>>, %arg6: memref<1x256xf32, #tpu.memory_space<vmem>>, %arg7: memref<1xf32, #tpu.memory_space<smem>>, %arg8: memref<1x16xf32, #tpu.memory_space<vmem>>) attributes {dimension_semantics = [#tpu.dimension_semantics<arbitrary>], iteration_bounds = array<i64: 1>, scalar_prefetch = 0 : i64, scratch_operands = 0 : i64, tpu.core_type = #tpu.core_type<tc>, window_params = [{transform_indices = @transform_0, window_bounds = array<i64: 16, 1024>}, {pipeline_mode = #tpu.pipeline_mode<synchronous>, transform_indices = @transform_1, window_bounds = array<i64: 1024, 512>}, {pipeline_mode = #tpu.pipeline_mode<synchronous>, transform_indices = @transform_2, window_bounds = array<i64: 1, 512>}, {pipeline_mode = #tpu.pipeline_mode<synchronous>, transform_indices = @transform_3, window_bounds = array<i64: 512, 256>}, {pipeline_mode = #tpu.pipeline_mode<synchronous>, transform_indices = @transform_4, window_bounds = array<i64: 1, 256>}, {pipeline_mode = #tpu.pipeline_mode<synchronous>, transform_indices = @transform_5, window_bounds = array<i64: 1, 256>}, {transform_indices = @transform_6, window_bounds = array<i64: 1>}, {transform_indices = @transform_7, window_bounds = array<i64: 1, 16>}]} {
    %c0 = arith.constant 0 : index
    %c0_0 = arith.constant 0 : index
    %0 = vector.load %arg1[%c0, %c0_0] : memref<16x1024xf32, #tpu.memory_space<vmem>>, vector<16x1024xf32>
    %1 = arith.truncf %0 : vector<16x1024xf32> to vector<16x1024xbf16>
    %c0_1 = arith.constant 0 : index
    %c0_2 = arith.constant 0 : index
    %2 = vector.load %arg2[%c0_1, %c0_2] : memref<1024x512xbf16, #tpu.memory_space<vmem>>, vector<1024x512xbf16>
    %cst = arith.constant dense<0.000000e+00> : vector<16x512xf32>
    %3 = tpu.matmul %1, %2, %cst {dimension_numbers = #tpu.dot_dimension_numbers<[1], [0], [0], [1], [0, 0, 1, 1], [], []>} : vector<16x1024xbf16>, vector<1024x512xbf16>, vector<16x512xf32> -> vector<16x512xf32>
    %c0_3 = arith.constant 0 : index
    %c0_4 = arith.constant 0 : index
    %4 = vector.load %arg3[%c0_3, %c0_4] : memref<1x512xf32, #tpu.memory_space<vmem>>, vector<1x512xf32>
    %5 = vector.broadcast %4 : vector<1x512xf32> to vector<16x512xf32>
    %6 = arith.addf %3, %5 : vector<16x512xf32>
    %cst_5 = arith.constant 0.000000e+00 : f32
    %7 = vector.broadcast %cst_5 : f32 to vector<16x512xf32>
    %8 = arith.maximumf %6, %7 : vector<16x512xf32>
    %9 = arith.truncf %8 : vector<16x512xf32> to vector<16x512xbf16>
    %c0_6 = arith.constant 0 : index
    %c0_7 = arith.constant 0 : index
    %10 = vector.load %arg4[%c0_6, %c0_7] : memref<512x256xbf16, #tpu.memory_space<vmem>>, vector<512x256xbf16>
    %cst_8 = arith.constant dense<0.000000e+00> : vector<16x256xf32>
    %11 = tpu.matmul %9, %10, %cst_8 {dimension_numbers = #tpu.dot_dimension_numbers<[1], [0], [0], [1], [0, 0, 1, 1], [], []>} : vector<16x512xbf16>, vector<512x256xbf16>, vector<16x256xf32> -> vector<16x256xf32>
    %c0_9 = arith.constant 0 : index
    %c0_10 = arith.constant 0 : index
    %12 = vector.load %arg5[%c0_9, %c0_10] : memref<1x256xf32, #tpu.memory_space<vmem>>, vector<1x256xf32>
    %13 = vector.broadcast %12 : vector<1x256xf32> to vector<16x256xf32>
    %14 = arith.addf %11, %13 : vector<16x256xf32>
    %cst_11 = arith.constant 0.000000e+00 : f32
    %15 = vector.broadcast %cst_11 : f32 to vector<16x256xf32>
    %16 = arith.maximumf %14, %15 : vector<16x256xf32>
    %c0_12 = arith.constant 0 : index
    %c0_13 = arith.constant 0 : index
    %17 = vector.load %arg6[%c0_12, %c0_13] : memref<1x256xf32, #tpu.memory_space<vmem>>, vector<1x256xf32>
    %18 = vector.broadcast %17 : vector<1x256xf32> to vector<16x256xf32>
    %19 = arith.mulf %16, %18 : vector<16x256xf32>
    %cst_14 = arith.constant dense<0.000000e+00> : vector<16xf32>
    %20 = vector.multi_reduction <add>, %19, %cst_14 [1] : vector<16x256xf32> to vector<16xf32>
    %c0_15 = arith.constant 0 : index
    %21 = memref.load %arg7[%c0_15] : memref<1xf32, #tpu.memory_space<smem>>
    %22 = vector.broadcast %21 : f32 to vector<16xf32>
    %23 = arith.addf %20, %22 : vector<16xf32>
    %24 = arith.subf %23, %23 : vector<16xf32>
    %25 = math.exp %24 : vector<16xf32>
    %c0_16 = arith.constant 0 : index
    %c0_17 = arith.constant 0 : index
    %26 = vector.load %arg8[%c0_16, %c0_17] : memref<1x16xf32, #tpu.memory_space<vmem>>, vector<1x16xf32>
    %27 = vector.shape_cast %26 : vector<1x16xf32> to vector<16xf32>
    %28 = vector.shape_cast %25 : vector<16xf32> to vector<1x16xf32>
    tpu.vector_store %arg8[%c0_16, %c0_17], %28 {strides = array<i32>} : memref<1x16xf32, #tpu.memory_space<vmem>>, vector<1x16xf32>,
    return
  }
  func.func @transform_0(%arg0: i32) -> (i32, i32) {
    %c0_i32 = arith.constant 0 : i32
    %c0_i32_0 = arith.constant 0 : i32
    return %arg0, %c0_i32 : i32, i32
  }
  func.func @transform_1(%arg0: i32) -> (i32, i32) {
    %c0_i32 = arith.constant 0 : i32
    %c0_i32_0 = arith.constant 0 : i32
    %c0_i32_1 = arith.constant 0 : i32
    return %c0_i32, %c0_i32_0 : i32, i32
  }
  func.func @transform_2(%arg0: i32) -> (i32, i32) {
    %c0_i32 = arith.constant 0 : i32
    %c0_i32_0 = arith.constant 0 : i32
    %c0_i32_1 = arith.constant 0 : i32
    return %c0_i32, %c0_i32_0 : i32, i32
  }
  func.func @transform_3(%arg0: i32) -> (i32, i32) {
    %c0_i32 = arith.constant 0 : i32
    %c0_i32_0 = arith.constant 0 : i32
    %c0_i32_1 = arith.constant 0 : i32
    return %c0_i32, %c0_i32_0 : i32, i32
  }
  func.func @transform_4(%arg0: i32) -> (i32, i32) {
    %c0_i32 = arith.constant 0 : i32
    %c0_i32_0 = arith.constant 0 : i32
    %c0_i32_1 = arith.constant 0 : i32
    return %c0_i32, %c0_i32_0 : i32, i32
  }
  func.func @transform_5(%arg0: i32) -> (i32, i32) {
    %c0_i32 = arith.constant 0 : i32
    %c0_i32_0 = arith.constant 0 : i32
    %c0_i32_1 = arith.constant 0 : i32
    return %c0_i32, %c0_i32_0 : i32, i32
  }
  func.func @transform_6(%arg0: i32) -> i32 {
    %c0_i32 = arith.constant 0 : i32
    %c0_i32_0 = arith.constant 0 : i32
    return %c0_i32 : i32
  }
  func.func @transform_7(%arg0: i32) -> (i32, i32) {
    %c0_i32 = arith.constant 0 : i32
    %c0_i32_0 = arith.constant 0 : i32
    return %c0_i32, %arg0 : i32, i32
  }
}

</mosaic_0001>

<llo_original>
// kernel: ann_forward.1
$region0: #{ann_forward.1}
  #allocation0 [shape = 'u32[]', space=smem, size = 0x4, offset = 0x4, fixed_abs, tag = 'smem constant byte address 0x4 - core index']
  #allocation1 [shape = 'u32[144,128]{1,0:T(1,128)}', space=vmem, size = 0x12000, scoped, tag = 'internal scratch']
  #allocation2 [shape = 'f32[1]{0:T(128)S(6)}', space=smem, size = 0x200, scoped, tag = 'scoped memory for ann_forward.1']
  %s0 = inlined_call_operand.vmem [shape: f32[16,1024], index: 0, kind: input, shape index: {}]
  %s1 = inlined_call_operand.hbm [shape: bf16[1024,512], index: 1, kind: input, shape index: {}]
  %s2 = inlined_call_operand.vmem [shape: f32[1,512], index: 2, kind: input, shape index: {}]
  %s3 = inlined_call_operand.hbm [shape: bf16[512,256], index: 3, kind: input, shape index: {}]
  %s4 = inlined_call_operand.vmem [shape: f32[1,256], index: 4, kind: input, shape index: {}]
  %s5 = inlined_call_operand.vmem [shape: f32[1,256], index: 5, kind: input, shape index: {}]
  %s6 = inlined_call_operand.<no memory space> [shape: f32[1], index: 6, kind: input, shape index: {}]
  %s7 = inlined_call_operand.vmem [shape: f32[1,16], index: 7, kind: output, shape index: {}]
  %s8 = sld [smem:[#allocation0]]
  $region46: #{ann_forward.1} parent=0
    _
  %s10 = ssub.s32 1, %s8
  %s11 = scalar_select 0, %s10, %s8
  %12 = sst [smem:[#allocation2]] %s6
  $region1: #{ann_forward.1} parent=0
    #allocation3 [shape = 'u8[1048576]{0}', space=vmem, size = 0x100000, scoped, tag = 'input window, operand 1, single buffered']
    #allocation4 [shape = 's32[1]{0}', space=sflag, size = 0x4, scoped, tag = 'scoped memory for ann_forward.1']
    #allocation5 [shape = 'u8[262144]{0}', space=vmem, size = 0x40000, scoped, tag = 'input window, operand 3, single buffered']
    #allocation6 [shape = 's32[1]{0}', space=sflag, size = 0x4, scoped, tag = 'scoped memory for ann_forward.1']
    %13 = vsyncpa [#allocation4], 0
    %14 = vsyncpa [#allocation6], 0
    // Predicated region
    $region2: #{ann_forward.1} parent=1 // pred_check
      _
    $region3: #{ann_forward.1} parent=1 // pred_check_branch
      %16 = sbr.rel (0) target = $region5
    $region4: #{ann_forward.1} parent=1 // pred_region
      _
    $region5: #{ann_forward.1} parent=1 // pred_fallthru
      _
    // Predicated region
    $region6: #{ann_forward.1} parent=1 // pred_check
      _
    $region7: #{ann_forward.1} parent=1 // pred_check_branch
      %18 = sbr.rel (0) target = $region9
    $region8: #{ann_forward.1} parent=1 // pred_region
      %s20 = ssub.s32 32768, 32768
      %21 = vsyncadd [#allocation4], %s20
      %s22 = sshll.u32 [#allocation3], 4
      %s23 = int_to_ptr.vmem [resolvable:$true] %s22
      %28 = dma.hbm_to_vmem [thread:$0]  %s1, 32768, %s23, [#allocation4], 256, 256, 16
    $region9: #{ann_forward.1} parent=1 // pred_fallthru
      _
    // Predicated region
    $region10: #{ann_forward.1} parent=1 // pred_check
      _
    $region11: #{ann_forward.1} parent=1 // pred_check_branch
      %30 = sbr.rel (0) target = $region13
    $region12: #{ann_forward.1} parent=1 // pred_region
      _
    $region13: #{ann_forward.1} parent=1 // pred_fallthru
      _
    // Predicated region
    $region14: #{ann_forward.1} parent=1 // pred_check
      _
    $region15: #{ann_forward.1} parent=1 // pred_check_branch
      %32 = sbr.rel (0) target = $region17
    $region16: #{ann_forward.1} parent=1 // pred_region
      %s34 = ssub.s32 8192, 8192
      %35 = vsyncadd [#allocation6], %s34
      %s36 = sshll.u32 [#allocation5], 4
      %s37 = int_to_ptr.vmem [resolvable:$true] %s36
      %42 = dma.hbm_to_vmem [thread:$0]  %s3, 8192, %s37, [#allocation6], 128, 128, 8
    $region17: #{ann_forward.1} parent=1 // pred_fallthru
      _
    // Predicated region
    $region18: #{ann_forward.1} parent=1 // pred_check
      _
    $region19: #{ann_forward.1} parent=1 // pred_check_branch
      %44 = sbr.rel (0) target = $region21
    $region20: #{ann_forward.1} parent=1 // pred_region
      _
    $region21: #{ann_forward.1} parent=1 // pred_fallthru
      _
    // Predicated region
    $region22: #{ann_forward.1} parent=1 // pred_check
      _
    $region23: #{ann_forward.1} parent=1 // pred_check_branch
      %46 = sbr.rel (0) target = $region25
    $region24: #{ann_forward.1} parent=1 // pred_region
      _
    $region25: #{ann_forward.1} parent=1 // pred_fallthru
      _
    // Predicated region
    $region26: #{ann_forward.1} parent=1 // pred_check
      _
    $region27: #{ann_forward.1} parent=1 // pred_check_branch
      %48 = sbr.rel (0) target = $region29
    $region28: #{ann_forward.1} parent=1 // pred_region
      _
    $region29: #{ann_forward.1} parent=1 // pred_fallthru
      _
    // Predicated region
    $region30: #{ann_forward.1} parent=1 // pred_check
      _
    $region31: #{ann_forward.1} parent=1 // pred_check_branch
      %50 = sbr.rel (0) target = $region33
    $region32: #{ann_forward.1} parent=1 // pred_region
      %51 = dma.done [#allocation4], 32768
    $region33: #{ann_forward.1} parent=1 // pred_fallthru
      _
    // Predicated region
    $region34: #{ann_forward.1} parent=1 // pred_check
      _
    $region35: #{ann_forward.1} parent=1 // pred_check_branch
      %53 = sbr.rel (0) target = $region37
    $region36: #{ann_forward.1} parent=1 // pred_region
      %54 = dma.done [#allocation6], 8192
    $region37: #{ann_forward.1} parent=1 // pred_fallthru
      _
    %v55 = vld [vmem:[%s0] sm:$0xff]
    %v56 = vld [vmem:[%s0 + $0x8] sm:$0xff]
    %v57 = vld [vmem:[%s0 + $0x10] sm:$0xff]
    %v58 = vld [vmem:[%s0 + $0x18] sm:$0xff]
    %v59 = vld [vmem:[%s0 + $0x20] sm:$0xff]
    %v60 = vld [vmem:[%s0 + $0x28] sm:$0xff]
    %v61 = vld [vmem:[%s0 + $0x30] sm:$0xff]
    %v62 = vld [vmem:[%s0 + $0x38] sm:$0xff]
    %v63 = vld [vmem:[%s0 + $0x40] sm:$0xff]
    %v64 = vld [vmem:[%s0 + $0x48] sm:$0xff]
    %v65 = vld [vmem:[%s0 + $0x50] sm:$0xff]
    %v66 = vld [vmem:[%s0 + $0x58] sm:$0xff]
    %v67 = vld [vmem:[%s0 + $0x60] sm:$0xff]
    %v68 = vld [vmem:[%s0 + $0x68] sm:$0xff]
    %v69 = vld [vmem:[%s0 + $0x70] sm:$0xff]
    %v70 = vld [vmem:[%s0 + $0x78] sm:$0xff]
    %v71 = vpack.c.bf16 %v63, %v55
    %v72 = vpack.c.bf16 %v64, %v56
    %v73 = vpack.c.bf16 %v65, %v57
    %v74 = vpack.c.bf16 %v66, %v58
    %v75 = vpack.c.bf16 %v67, %v59
    %v76 = vpack.c.bf16 %v68, %v60
    %v77 = vpack.c.bf16 %v69, %v61
    %v78 = vpack.c.bf16 %v70, %v62
    %v79 = vld [vmem:[#allocation3] sm:$0xff]
    %v80 = vld [vmem:[#allocation3 + $0x8] sm:$0xff]
    %v81 = vld [vmem:[#allocation3 + $0x10] sm:$0xff]
    %v82 = vld [vmem:[#allocation3 + $0x18] sm:$0xff]
    %v83 = vld [vmem:[#allocation3 + $0x20] sm:$0xff]
    %v84 = vld [vmem:[#allocation3 + $0x28] sm:$0xff]
    %v85 = vld [vmem:[#allocation3 + $0x30] sm:$0xff]
    %v86 = vld [vmem:[#allocation3 + $0x38] sm:$0xff]
    %v87 = vld [vmem:[#allocation3 + $0x40] sm:$0xff]
    %v88 = vld [vmem:[#allocation3 + $0x48] sm:$0xff]
    %v89 = vld [vmem:[#allocation3 + $0x50] sm:$0xff]
    %v90 = vld [vmem:[#allocation3 + $0x58] sm:$0xff]
    %v91 = vld [vmem:[#allocation3 + $0x60] sm:$0xff]
    %v92 = vld [vmem:[#allocation3 + $0x68] sm:$0xff]
    %v93 = vld [vmem:[#allocation3 + $0x70] sm:$0xff]
    %v94 = vld [vmem:[#allocation3 + $0x78] sm:$0xff]
    %v95 = vld [vmem:[#allocation3 + $0x80] sm:$0xff]
    %v96 = vld [vmem:[#allocation3 + $0x88] sm:$0xff]
    %v97 = vld [vmem:[#allocation3 + $0x90] sm:$0xff]
    %v98 = vld [vmem:[#allocation3 + $0x98] sm:$0xff]
    %v99 = vld [vmem:[#allocation3 + $0xa0] sm:$0xff]
    %v100 = vld [vmem:[#allocation3 + $0xa8] sm:$0xff]
    %v101 = vld [vmem:[#allocation3 + $0xb0] sm:$0xff]
    %v102 = vld [vmem:[#allocation3 + $0xb8] sm:$0xff]
    %v103 = vld [vmem:[#allocation3 + $0xc0] sm:$0xff]
    %v104 = vld [vmem:[#allocation3 + $0xc8] sm:$0xff]
    %v105 = vld [vmem:[#allocation3 + $0xd0] sm:$0xff]
    %v106 = vld [vmem:[#allocation3 + $0xd8] sm:$0xff]
    %v107 = vld [vmem:[#allocation3 + $0xe0] sm:$0xff]
    %v108 = vld [vmem:[#allocation3 + $0xe8] sm:$0xff]
    %v109 = vld [vmem:[#allocation3 + $0xf0] sm:$0xff]
    %v110 = vld [vmem:[#allocation3 + $0xf8] sm:$0xff]
    %v111 = vld [vmem:[#allocation3 + $0x100] sm:$0xff]
    %v112 = vld [vmem:[#allocation3 + $0x108] sm:$0xff]
    %v113 = vld [vmem:[#allocation3 + $0x110] sm:$0xff]
    %v114 = vld [vmem:[#allocation3 + $0x118] sm:$0xff]
    %v115 = vld [vmem:[#allocation3 + $0x120] sm:$0xff]
    %v116 = vld [vmem:[#allocation3 + $0x128] sm:$0xff]
    %v117 = vld [vmem:[#allocation3 + $0x130] sm:$0xff]
    %v118 = vld [vmem:[#allocation3 + $0x138] sm:$0xff]
    %v119 = vld [vmem:[#allocation3 + $0x140] sm:$0xff]
    %v120 = vld [vmem:[#allocation3 + $0x148] sm:$0xff]
    %v121 = vld [vmem:[#allocation3 + $0x150] sm:$0xff]
    %v122 = vld [vmem:[#allocation3 + $0x158] sm:$0xff]
    %v123 = vld [vmem:[#allocation3 + $0x160] sm:$0xff]
    %v124 = vld [vmem:[#allocation3 + $0x168] sm:$0xff]
    %v125 = vld [vmem:[#allocation3 + $0x170] sm:$0xff]
    %v126 = vld [vmem:[#allocation3 + $0x178] sm:$0xff]
    %v127 = vld [vmem:[#allocation3 + $0x180] sm:$0xff]
    %v128 = vld [vmem:[#allocation3 + $0x188] sm:$0xff]
    %v129 = vld [vmem:[#allocation3 + $0x190] sm:$0xff]
    %v130 = vld [vmem:[#allocation3 + $0x198] sm:$0xff]
    %v131 = vld [vmem:[#allocation3 + $0x1a0] sm:$0xff]
    %v132 = vld [vmem:[#allocation3 + $0x1a8] sm:$0xff]
    %v133 = vld [vmem:[#allocation3 + $0x1b0] sm:$0xff]
    %v134 = vld [vmem:[#allocation3 + $0x1b8] sm:$0xff]
    %v135 = vld [vmem:[#allocation3 + $0x1c0] sm:$0xff]
    %v136 = vld [vmem:[#allocation3 + $0x1c8] sm:$0xff]
    %v137 = vld [vmem:[#allocation3 + $0x1d0] sm:$0xff]
    %v138 = vld [vmem:[#allocation3 + $0x1d8] sm:$0xff]
    %v139 = vld [vmem:[#allocation3 + $0x1e0] sm:$0xff]
    %v140 = vld [vmem:[#allocation3 + $0x1e8] sm:$0xff]
    %v141 = vld [vmem:[#allocation3 + $0x1f0] sm:$0xff]
    %v142 = vld [vmem:[#allocation3 + $0x1f8] sm:$0xff]
    %v143 = vld [vmem:[#allocation3 + $0x200] sm:$0xff]
    %v144 = vld [vmem:[#allocation3 + $0x208] sm:$0xff]
    %v145 = vld [vmem:[#allocation3 + $0x210] sm:$0xff]
    %v146 = vld [vmem:[#allocation3 + $0x218] sm:$0xff]
    %v147 = vld [vmem:[#allocation3 + $0x220] sm:$0xff]
    %v148 = vld [vmem:[#allocation3 + $0x228] sm:$0xff]
    %v149 = vld [vmem:[#allocation3 + $0x230] sm:$0xff]
    %v150 = vld [vmem:[#allocation3 + $0x238] sm:$0xff]
    %v151 = vld [vmem:[#allocation3 + $0x240] sm:$0xff]
    %v152 = vld [vmem:[#allocation3 + $0x248] sm:$0xff]
    %v153 = vld [vmem:[#allocation3 + $0x250] sm:$0xff]
    %v154 = vld [vmem:[#allocation3 + $0x258] sm:$0xff]
    %v155 = vld [vmem:[#allocation3 + $0x260] sm:$0xff]
    %v156 = vld [vmem:[#allocation3 + $0x268] sm:$0xff]
    %v157 = vld [vmem:[#allocation3 + $0x270] sm:$0xff]
    %v158 = vld [vmem:[#allocation3 + $0x278] sm:$0xff]
    %v159 = vld [vmem:[#allocation3 + $0x280] sm:$0xff]
    %v160 = vld [vmem:[#allocation3 + $0x288] sm:$0xff]
    %v161 = vld [vmem:[#allocation3 + $0x290] sm:$0xff]
    %v162 = vld [vmem:[#allocation3 + $0x298] sm:$0xff]
    %v163 = vld [vmem:[#allocation3 + $0x2a0] sm:$0xff]
    %v164 = vld [vmem:[#allocation3 + $0x2a8] sm:$0xff]
    %v165 = vld [vmem:[#allocation3 + $0x2b0] sm:$0xff]
    %v166 = vld [vmem:[#allocation3 + $0x2b8] sm:$0xff]
    %v167 = vld [vmem:[#allocation3 + $0x2c0] sm:$0xff]
    %v168 = vld [vmem:[#allocation3 + $0x2c8] sm:$0xff]
    %v169 = vld [vmem:[#allocation3 + $0x2d0] sm:$0xff]
    %v170 = vld [vmem:[#allocation3 + $0x2d8] sm:$0xff]
    %v171 = vld [vmem:[#allocation3 + $0x2e0] sm:$0xff]
    %v172 = vld [vmem:[#allocation3 + $0x2e8] sm:$0xff]
    %v173 = vld [vmem:[#allocation3 + $0x2f0] sm:$0xff]
    %v174 = vld [vmem:[#allocation3 + $0x2f8] sm:$0xff]
    %v175 = vld [vmem:[#allocation3 + $0x300] sm:$0xff]
    %v176 = vld [vmem:[#allocation3 + $0x308] sm:$0xff]
    %v177 = vld [vmem:[#allocation3 + $0x310] sm:$0xff]
    %v178 = vld [vmem:[#allocation3 + $0x318] sm:$0xff]
    %v179 = vld [vmem:[#allocation3 + $0x320] sm:$0xff]
    %v180 = vld [vmem:[#allocation3 + $0x328] sm:$0xff]
    %v181 = vld [vmem:[#allocation3 + $0x330] sm:$0xff]
    %v182 = vld [vmem:[#allocation3 + $0x338] sm:$0xff]
    %v183 = vld [vmem:[#allocation3 + $0x340] sm:$0xff]
    %v184 = vld [vmem:[#allocation3 + $0x348] sm:$0xff]
    %v185 = vld [vmem:[#allocation3 + $0x350] sm:$0xff]
    %v186 = vld [vmem:[#allocation3 + $0x358] sm:$0xff]
    %v187 = vld [vmem:[#allocation3 + $0x360] sm:$0xff]
    %v188 = vld [vmem:[#allocation3 + $0x368] sm:$0xff]
    %v189 = vld [vmem:[#allocation3 + $0x370] sm:$0xff]
    %v190 = vld [vmem:[#allocation3 + $0x378] sm:$0xff]
    %v191 = vld [vmem:[#allocation3 + $0x380] sm:$0xff]
    %v192 = vld [vmem:[#allocation3 + $0x388] sm:$0xff]
    %v193 = vld [vmem:[#allocation3 + $0x390] sm:$0xff]
    %v194 = vld [vmem:[#allocation3 + $0x398] sm:$0xff]
    %v195 = vld [vmem:[#allocation3 + $0x3a0] sm:$0xff]
    %v196 = vld [vmem:[#allocation3 + $0x3a8] sm:$0xff]
    %v197 = vld [vmem:[#allocation3 + $0x3b0] sm:$0xff]
    %v198 = vld [vmem:[#allocation3 + $0x3b8] sm:$0xff]
    %v199 = vld [vmem:[#allocation3 + $0x3c0] sm:$0xff]
    %v200 = vld [vmem:[#allocation3 + $0x3c8] sm:$0xff]
    %v201 = vld [vmem:[#allocation3 + $0x3d0] sm:$0xff]
    %v202 = vld [vmem:[#allocation3 + $0x3d8] sm:$0xff]
    %v203 = vld [vmem:[#allocation3 + $0x3e0] sm:$0xff]
    %v204 = vld [vmem:[#allocation3 + $0x3e8] sm:$0xff]
    %v205 = vld [vmem:[#allocation3 + $0x3f0] sm:$0xff]
    %v206 = vld [vmem:[#allocation3 + $0x3f8] sm:$0xff]
    %v207 = vld [vmem:[#allocation3 + $0x400] sm:$0xff]
    %v208 = vld [vmem:[#allocation3 + $0x408] sm:$0xff]
    %v209 = vld [vmem:[#allocation3 + $0x410] sm:$0xff]
    %v210 = vld [vmem:[#allocation3 + $0x418] sm:$0xff]
    %v211 = vld [vmem:[#allocation3 + $0x420] sm:$0xff]
    %v212 = vld [vmem:[#allocation3 + $0x428] sm:$0xff]
    %v213 = vld [vmem:[#allocation3 + $0x430] sm:$0xff]
    %v214 = vld [vmem:[#allocation3 + $0x438] sm:$0xff]
    %v215 = vld [vmem:[#allocation3 + $0x440] sm:$0xff]
    %v216 = vld [vmem:[#allocation3 + $0x448] sm:$0xff]
    %v217 = vld [vmem:[#allocation3 + $0x450] sm:$0xff]
    %v218 = vld [vmem:[#allocation3 + $0x458] sm:$0xff]
    %v219 = vld [vmem:[#allocation3 + $0x460] sm:$0xff]
    %v220 = vld [vmem:[#allocation3 + $0x468] sm:$0xff]
    %v221 = vld [vmem:[#allocation3 + $0x470] sm:$0xff]
    %v222 = vld [vmem:[#allocation3 + $0x478] sm:$0xff]
    %v223 = vld [vmem:[#allocation3 + $0x480] sm:$0xff]
    %v224 = vld [vmem:[#allocation3 + $0x488] sm:$0xff]
    %v225 = vld [vmem:[#allocation3 + $0x490] sm:$0xff]
    %v226 = vld [vmem:[#allocation3 + $0x498] sm:$0xff]
    %v227 = vld [vmem:[#allocation3 + $0x4a0] sm:$0xff]
    %v228 = vld [vmem:[#allocation3 + $0x4a8] sm:$0xff]
    %v229 = vld [vmem:[#allocation3 + $0x4b0] sm:$0xff]
    %v230 = vld [vmem:[#allocation3 + $0x4b8] sm:$0xff]
    %v231 = vld [vmem:[#allocation3 + $0x4c0] sm:$0xff]
    %v232 = vld [vmem:[#allocation3 + $0x4c8] sm:$0xff]
    %v233 = vld [vmem:[#allocation3 + $0x4d0] sm:$0xff]
    %v234 = vld [vmem:[#allocation3 + $0x4d8] sm:$0xff]
    %v235 = vld [vmem:[#allocation3 + $0x4e0] sm:$0xff]
    %v236 = vld [vmem:[#allocation3 + $0x4e8] sm:$0xff]
    %v237 = vld [vmem:[#allocation3 + $0x4f0] sm:$0xff]
    %v238 = vld [vmem:[#allocation3 + $0x4f8] sm:$0xff]
    %v239 = vld [vmem:[#allocation3 + $0x500] sm:$0xff]
    %v240 = vld [vmem:[#allocation3 + $0x508] sm:$0xff]
    %v241 = vld [vmem:[#allocation3 + $0x510] sm:$0xff]
    %v242 = vld [vmem:[#allocation3 + $0x518] sm:$0xff]
    %v243 = vld [vmem:[#allocation3 + $0x520] sm:$0xff]
    %v244 = vld [vmem:[#allocation3 + $0x528] sm:$0xff]
    %v245 = vld [vmem:[#allocation3 + $0x530] sm:$0xff]
    %v246 = vld [vmem:[#allocation3 + $0x538] sm:$0xff]
    %v247 = vld [vmem:[#allocation3 + $0x540] sm:$0xff]
    %v248 = vld [vmem:[#allocation3 + $0x548] sm:$0xff]
    %v249 = vld [vmem:[#allocation3 + $0x550] sm:$0xff]
    %v250 = vld [vmem:[#allocation3 + $0x558] sm:$0xff]
    %v251 = vld [vmem:[#allocation3 + $0x560] sm:$0xff]
    %v252 = vld [vmem:[#allocation3 + $0x568] sm:$0xff]
    %v253 = vld [vmem:[#allocation3 + $0x570] sm:$0xff]
    %v254 = vld [vmem:[#allocation3 + $0x578] sm:$0xff]
    %v255 = vld [vmem:[#allocation3 + $0x580] sm:$0xff]
    %v256 = vld [vmem:[#allocation3 + $0x588] sm:$0xff]
    %v257 = vld [vmem:[#allocation3 + $0x590] sm:$0xff]
    %v258 = vld [vmem:[#allocation3 + $0x598] sm:$0xff]
    %v259 = vld [vmem:[#allocation3 + $0x5a0] sm:$0xff]
    %v260 = vld [vmem:[#allocation3 + $0x5a8] sm:$0xff]
    %v261 = vld [vmem:[#allocation3 + $0x5b0] sm:$0xff]
    %v262 = vld [vmem:[#allocation3 + $0x5b8] sm:$0xff]
    %v263 = vld [vmem:[#allocation3 + $0x5c0] sm:$0xff]
    %v264 = vld [vmem:[#allocation3 + $0x5c8] sm:$0xff]
    %v265 = vld [vmem:[#allocation3 + $0x5d0] sm:$0xff]
    %v266 = vld [vmem:[#allocation3 + $0x5d8] sm:$0xff]
    %v267 = vld [vmem:[#allocation3 + $0x5e0] sm:$0xff]
    %v268 = vld [vmem:[#allocation3 + $0x5e8] sm:$0xff]
    %v269 = vld [vmem:[#allocation3 + $0x5f0] sm:$0xff]
    %v270 = vld [vmem:[#allocation3 + $0x5f8] sm:$0xff]
    %v271 = vld [vmem:[#allocation3 + $0x600] sm:$0xff]
    %v272 = vld [vmem:[#allocation3 + $0x608] sm:$0xff]
    %v273 = vld [vmem:[#allocation3 + $0x610] sm:$0xff]
    %v274 = vld [vmem:[#allocation3 + $0x618] sm:$0xff]
    %v275 = vld [vmem:[#allocation3 + $0x620] sm:$0xff]
    %v276 = vld [vmem:[#allocation3 + $0x628] sm:$0xff]
    %v277 = vld [vmem:[#allocation3 + $0x630] sm:$0xff]
    %v278 = vld [vmem:[#allocation3 + $0x638] sm:$0xff]
    %v279 = vld [vmem:[#allocation3 + $0x640] sm:$0xff]
    %v280 = vld [vmem:[#allocation3 + $0x648] sm:$0xff]
    %v281 = vld [vmem:[#allocation3 + $0x650] sm:$0xff]
    %v282 = vld [vmem:[#allocation3 + $0x658] sm:$0xff]
    %v283 = vld [vmem:[#allocation3 + $0x660] sm:$0xff]
    %v284 = vld [vmem:[#allocation3 + $0x668] sm:$0xff]
    %v285 = vld [vmem:[#allocation3 + $0x670] sm:$0xff]
    %v286 = vld [vmem:[#allocation3 + $0x678] sm:$0xff]
    %v287 = vld [vmem:[#allocation3 + $0x680] sm:$0xff]
    %v288 = vld [vmem:[#allocation3 + $0x688] sm:$0xff]
    %v289 = vld [vmem:[#allocation3 + $0x690] sm:$0xff]
    %v290 = vld [vmem:[#allocation3 + $0x698] sm:$0xff]
    %v291 = vld [vmem:[#allocation3 + $0x6a0] sm:$0xff]
    %v292 = vld [vmem:[#allocation3 + $0x6a8] sm:$0xff]
    %v293 = vld [vmem:[#allocation3 + $0x6b0] sm:$0xff]
    %v294 = vld [vmem:[#allocation3 + $0x6b8] sm:$0xff]
    %v295 = vld [vmem:[#allocation3 + $0x6c0] sm:$0xff]
    %v296 = vld [vmem:[#allocation3 + $0x6c8] sm:$0xff]
    %v297 = vld [vmem:[#allocation3 + $0x6d0] sm:$0xff]
    %v298 = vld [vmem:[#allocation3 + $0x6d8] sm:$0xff]
    %v299 = vld [vmem:[#allocation3 + $0x6e0] sm:$0xff]
    %v300 = vld [vmem:[#allocation3 + $0x6e8] sm:$0xff]
    %v301 = vld [vmem:[#allocation3 + $0x6f0] sm:$0xff]
    %v302 = vld [vmem:[#allocation3 + $0x6f8] sm:$0xff]
    %v303 = vld [vmem:[#allocation3 + $0x700] sm:$0xff]
    %v304 = vld [vmem:[#allocation3 + $0x708] sm:$0xff]
    %v305 = vld [vmem:[#allocation3 + $0x710] sm:$0xff]
    %v306 = vld [vmem:[#allocation3 + $0x718] sm:$0xff]
    %v307 = vld [vmem:[#allocation3 + $0x720] sm:$0xff]
    %v308 = vld [vmem:[#allocation3 + $0x728] sm:$0xff]
    %v309 = vld [vmem:[#allocation3 + $0x730] sm:$0xff]
    %v310 = vld [vmem:[#allocation3 + $0x738] sm:$0xff]
    %v311 = vld [vmem:[#allocation3 + $0x740] sm:$0xff]
    %v312 = vld [vmem:[#allocation3 + $0x748] sm:$0xff]
    %v313 = vld [vmem:[#allocation3 + $0x750] sm:$0xff]
    %v314 = vld [vmem:[#allocation3 + $0x758] sm:$0xff]
    %v315 = vld [vmem:[#allocation3 + $0x760] sm:$0xff]
    %v316 = vld [vmem:[#allocation3 + $0x768] sm:$0xff]
    %v317 = vld [vmem:[#allocation3 + $0x770] sm:$0xff]
    %v318 = vld [vmem:[#allocation3 + $0x778] sm:$0xff]
    %v319 = vld [vmem:[#allocation3 + $0x780] sm:$0xff]
    %v320 = vld [vmem:[#allocation3 + $0x788] sm:$0xff]
    %v321 = vld [vmem:[#allocation3 + $0x790] sm:$0xff]
    %v322 = vld [vmem:[#allocation3 + $0x798] sm:$0xff]
    %v323 = vld [vmem:[#allocation3 + $0x7a0] sm:$0xff]
    %v324 = vld [vmem:[#allocation3 + $0x7a8] sm:$0xff]
    %v325 = vld [vmem:[#allocation3 + $0x7b0] sm:$0xff]
    %v326 = vld [vmem:[#allocation3 + $0x7b8] sm:$0xff]
    %v327 = vld [vmem:[#allocation3 + $0x7c0] sm:$0xff]
    %v328 = vld [vmem:[#allocation3 + $0x7c8] sm:$0xff]
    %v329 = vld [vmem:[#allocation3 + $0x7d0] sm:$0xff]
    %v330 = vld [vmem:[#allocation3 + $0x7d8] sm:$0xff]
    %v331 = vld [vmem:[#allocation3 + $0x7e0] sm:$0xff]
    %v332 = vld [vmem:[#allocation3 + $0x7e8] sm:$0xff]
    %v333 = vld [vmem:[#allocation3 + $0x7f0] sm:$0xff]
    %v334 = vld [vmem:[#allocation3 + $0x7f8] sm:$0xff]
    %v335 = vld [vmem:[%s2] sm:$0xf]
    %v337 = vlaneseq
    %v338 = vshrl.u32 %v337, 7
    %v339 = vsub.s32 0, %v338
    %v340 = vrot.slane %v335, %v339
    %v341 = vlaneseq
    %v342 = vshrl.u32 %v341, 7
    %v343 = vsub.s32 1, %v342
    %v344 = vrot.slane %v335, %v343
    %v345 = vlaneseq
    %v346 = vshrl.u32 %v345, 7
    %v347 = vsub.s32 2, %v346
    %v348 = vrot.slane %v335, %v347
    %v349 = vlaneseq
    %v350 = vshrl.u32 %v349, 7
    %v351 = vsub.s32 3, %v350
    %v352 = vrot.slane %v335, %v351
    %v613 = vunpack.c.l.b16 %v79
    %v614 = vunpack.c.h.b16 %v79
    %v615 = vunpack.c.l.b16 %v80
    %v616 = vunpack.c.h.b16 %v80
    %v617 = vunpack.c.l.b16 %v81
    %v618 = vunpack.c.h.b16 %v81
    %v619 = vunpack.c.l.b16 %v82
    %v620 = vunpack.c.h.b16 %v82
    %v621 = vunpack.c.l.b16 %v83
    %v622 = vunpack.c.h.b16 %v83
    %v623 = vunpack.c.l.b16 %v84
    %v624 = vunpack.c.h.b16 %v84
    %v625 = vunpack.c.l.b16 %v85
    %v626 = vunpack.c.h.b16 %v85
    %v627 = vunpack.c.l.b16 %v86
    %v628 = vunpack.c.h.b16 %v86
    %v629 = vunpack.c.l.b16 %v87
    %v630 = vunpack.c.h.b16 %v87
    %v631 = vunpack.c.l.b16 %v88
    %v632 = vunpack.c.h.b16 %v88
    %v633 = vunpack.c.l.b16 %v89
    %v634 = vunpack.c.h.b16 %v89
    %v635 = vunpack.c.l.b16 %v90
    %v636 = vunpack.c.h.b16 %v90
    %v637 = vunpack.c.l.b16 %v91
    %v638 = vunpack.c.h.b16 %v91
    %v639 = vunpack.c.l.b16 %v92
    %v640 = vunpack.c.h.b16 %v92
    %v641 = vunpack.c.l.b16 %v93
    %v642 = vunpack.c.h.b16 %v93
    %v643 = vunpack.c.l.b16 %v94
    %v644 = vunpack.c.h.b16 %v94
    %v645 = vunpack.c.l.b16 %v95
    %v646 = vunpack.c.h.b16 %v95
    %v647 = vunpack.c.l.b16 %v96
    %v648 = vunpack.c.h.b16 %v96
    %v649 = vunpack.c.l.b16 %v97
    %v650 = vunpack.c.h.b16 %v97
    %v651 = vunpack.c.l.b16 %v98
    %v652 = vunpack.c.h.b16 %v98
    %v653 = vunpack.c.l.b16 %v99
    %v654 = vunpack.c.h.b16 %v99
    %v655 = vunpack.c.l.b16 %v100
    %v656 = vunpack.c.h.b16 %v100
    %v657 = vunpack.c.l.b16 %v101
    %v658 = vunpack.c.h.b16 %v101
    %v659 = vunpack.c.l.b16 %v102
    %v660 = vunpack.c.h.b16 %v102
    %v661 = vunpack.c.l.b16 %v103
    %v662 = vunpack.c.h.b16 %v103
    %v663 = vunpack.c.l.b16 %v104
    %v664 = vunpack.c.h.b16 %v104
    %v665 = vunpack.c.l.b16 %v105
    %v666 = vunpack.c.h.b16 %v105
    %v667 = vunpack.c.l.b16 %v106
    %v668 = vunpack.c.h.b16 %v106
    %v669 = vunpack.c.l.b16 %v107
    %v670 = vunpack.c.h.b16 %v107
    %v671 = vunpack.c.l.b16 %v108
    %v672 = vunpack.c.h.b16 %v108
    %v673 = vunpack.c.l.b16 %v109
    %v674 = vunpack.c.h.b16 %v109
    %v675 = vunpack.c.l.b16 %v110
    %v676 = vunpack.c.h.b16 %v110
    %v677 = vunpack.c.l.b16 %v111
    %v678 = vunpack.c.h.b16 %v111
    %v679 = vunpack.c.l.b16 %v112
    %v680 = vunpack.c.h.b16 %v112
    %v681 = vunpack.c.l.b16 %v113
    %v682 = vunpack.c.h.b16 %v113
    %v683 = vunpack.c.l.b16 %v114
    %v684 = vunpack.c.h.b16 %v114
    %v685 = vunpack.c.l.b16 %v115
    %v686 = vunpack.c.h.b16 %v115
    %v687 = vunpack.c.l.b16 %v116
    %v688 = vunpack.c.h.b16 %v116
    %v689 = vunpack.c.l.b16 %v117
    %v690 = vunpack.c.h.b16 %v117
    %v691 = vunpack.c.l.b16 %v118
    %v692 = vunpack.c.h.b16 %v118
    %v693 = vunpack.c.l.b16 %v119
    %v694 = vunpack.c.h.b16 %v119
    %v695 = vunpack.c.l.b16 %v120
    %v696 = vunpack.c.h.b16 %v120
    %v697 = vunpack.c.l.b16 %v121
    %v698 = vunpack.c.h.b16 %v121
    %v699 = vunpack.c.l.b16 %v122
    %v700 = vunpack.c.h.b16 %v122
    %v701 = vunpack.c.l.b16 %v123
    %v702 = vunpack.c.h.b16 %v123
    %v703 = vunpack.c.l.b16 %v124
    %v704 = vunpack.c.h.b16 %v124
    %v705 = vunpack.c.l.b16 %v125
    %v706 = vunpack.c.h.b16 %v125
    %v707 = vunpack.c.l.b16 %v126
    %v708 = vunpack.c.h.b16 %v126
    %v709 = vunpack.c.l.b16 %v127
    %v710 = vunpack.c.h.b16 %v127
    %v711 = vunpack.c.l.b16 %v128
    %v712 = vunpack.c.h.b16 %v128
    %v713 = vunpack.c.l.b16 %v129
    %v714 = vunpack.c.h.b16 %v129
    %v715 = vunpack.c.l.b16 %v130
    %v716 = vunpack.c.h.b16 %v130
    %v717 = vunpack.c.l.b16 %v131
    %v718 = vunpack.c.h.b16 %v131
    %v719 = vunpack.c.l.b16 %v132
    %v720 = vunpack.c.h.b16 %v132
    %v721 = vunpack.c.l.b16 %v133
    %v722 = vunpack.c.h.b16 %v133
    %v723 = vunpack.c.l.b16 %v134
    %v724 = vunpack.c.h.b16 %v134
    %v725 = vunpack.c.l.b16 %v135
    %v726 = vunpack.c.h.b16 %v135
    %v727 = vunpack.c.l.b16 %v136
    %v728 = vunpack.c.h.b16 %v136
    %v729 = vunpack.c.l.b16 %v137
    %v730 = vunpack.c.h.b16 %v137
    %v731 = vunpack.c.l.b16 %v138
    %v732 = vunpack.c.h.b16 %v138
    %v733 = vunpack.c.l.b16 %v139
    %v734 = vunpack.c.h.b16 %v139
    %v735 = vunpack.c.l.b16 %v140
    %v736 = vunpack.c.h.b16 %v140
    %v737 = vunpack.c.l.b16 %v141
    %v738 = vunpack.c.h.b16 %v141
    %v739 = vunpack.c.l.b16 %v142
    %v740 = vunpack.c.h.b16 %v142
    %v741 = vunpack.c.l.b16 %v143
    %v742 = vunpack.c.h.b16 %v143
    %v743 = vunpack.c.l.b16 %v144
    %v744 = vunpack.c.h.b16 %v144
    %v745 = vunpack.c.l.b16 %v145
    %v746 = vunpack.c.h.b16 %v145
    %v747 = vunpack.c.l.b16 %v146
    %v748 = vunpack.c.h.b16 %v146
    %v749 = vunpack.c.l.b16 %v147
    %v750 = vunpack.c.h.b16 %v147
    %v751 = vunpack.c.l.b16 %v148
    %v752 = vunpack.c.h.b16 %v148
    %v753 = vunpack.c.l.b16 %v149
    %v754 = vunpack.c.h.b16 %v149
    %v755 = vunpack.c.l.b16 %v150
    %v756 = vunpack.c.h.b16 %v150
    %v757 = vunpack.c.l.b16 %v151
    %v758 = vunpack.c.h.b16 %v151
    %v759 = vunpack.c.l.b16 %v152
    %v760 = vunpack.c.h.b16 %v152
    %v761 = vunpack.c.l.b16 %v153
    %v762 = vunpack.c.h.b16 %v153
    %v763 = vunpack.c.l.b16 %v154
    %v764 = vunpack.c.h.b16 %v154
    %v765 = vunpack.c.l.b16 %v155
    %v766 = vunpack.c.h.b16 %v155
    %v767 = vunpack.c.l.b16 %v156
    %v768 = vunpack.c.h.b16 %v156
    %v769 = vunpack.c.l.b16 %v157
    %v770 = vunpack.c.h.b16 %v157
    %v771 = vunpack.c.l.b16 %v158
    %v772 = vunpack.c.h.b16 %v158
    %v773 = vunpack.c.l.b16 %v159
    %v774 = vunpack.c.h.b16 %v159
    %v775 = vunpack.c.l.b16 %v160
    %v776 = vunpack.c.h.b16 %v160
    %v777 = vunpack.c.l.b16 %v161
    %v778 = vunpack.c.h.b16 %v161
    %v779 = vunpack.c.l.b16 %v162
    %v780 = vunpack.c.h.b16 %v162
    %v781 = vunpack.c.l.b16 %v163
    %v782 = vunpack.c.h.b16 %v163
    %v783 = vunpack.c.l.b16 %v164
    %v784 = vunpack.c.h.b16 %v164
    %v785 = vunpack.c.l.b16 %v165
    %v786 = vunpack.c.h.b16 %v165
    %v787 = vunpack.c.l.b16 %v166
    %v788 = vunpack.c.h.b16 %v166
    %v789 = vunpack.c.l.b16 %v167
    %v790 = vunpack.c.h.b16 %v167
    %v791 = vunpack.c.l.b16 %v168
    %v792 = vunpack.c.h.b16 %v168
    %v793 = vunpack.c.l.b16 %v169
    %v794 = vunpack.c.h.b16 %v169
    %v795 = vunpack.c.l.b16 %v170
    %v796 = vunpack.c.h.b16 %v170
    %v797 = vunpack.c.l.b16 %v171
    %v798 = vunpack.c.h.b16 %v171
    %v799 = vunpack.c.l.b16 %v172
    %v800 = vunpack.c.h.b16 %v172
    %v801 = vunpack.c.l.b16 %v173
    %v802 = vunpack.c.h.b16 %v173
    %v803 = vunpack.c.l.b16 %v174
    %v804 = vunpack.c.h.b16 %v174
    %v805 = vunpack.c.l.b16 %v175
    %v806 = vunpack.c.h.b16 %v175
    %v807 = vunpack.c.l.b16 %v176
    %v808 = vunpack.c.h.b16 %v176
    %v809 = vunpack.c.l.b16 %v177
    %v810 = vunpack.c.h.b16 %v177
    %v811 = vunpack.c.l.b16 %v178
    %v812 = vunpack.c.h.b16 %v178
    %v813 = vunpack.c.l.b16 %v179
    %v814 = vunpack.c.h.b16 %v179
    %v815 = vunpack.c.l.b16 %v180
    %v816 = vunpack.c.h.b16 %v180
    %v817 = vunpack.c.l.b16 %v181
    %v818 = vunpack.c.h.b16 %v181
    %v819 = vunpack.c.l.b16 %v182
    %v820 = vunpack.c.h.b16 %v182
    %v821 = vunpack.c.l.b16 %v183
    %v822 = vunpack.c.h.b16 %v183
    %v823 = vunpack.c.l.b16 %v184
    %v824 = vunpack.c.h.b16 %v184
    %v825 = vunpack.c.l.b16 %v185
    %v826 = vunpack.c.h.b16 %v185
    %v827 = vunpack.c.l.b16 %v186
    %v828 = vunpack.c.h.b16 %v186
    %v829 = vunpack.c.l.b16 %v187
    %v830 = vunpack.c.h.b16 %v187
    %v831 = vunpack.c.l.b16 %v188
    %v832 = vunpack.c.h.b16 %v188
    %v833 = vunpack.c.l.b16 %v189
    %v834 = vunpack.c.h.b16 %v189
    %v835 = vunpack.c.l.b16 %v190
    %v836 = vunpack.c.h.b16 %v190
    %v837 = vunpack.c.l.b16 %v191
    %v838 = vunpack.c.h.b16 %v191
    %v839 = vunpack.c.l.b16 %v192
    %v840 = vunpack.c.h.b16 %v192
    %v841 = vunpack.c.l.b16 %v193
    %v842 = vunpack.c.h.b16 %v193
    %v843 = vunpack.c.l.b16 %v194
    %v844 = vunpack.c.h.b16 %v194
    %v845 = vunpack.c.l.b16 %v195
    %v846 = vunpack.c.h.b16 %v195
    %v847 = vunpack.c.l.b16 %v196
    %v848 = vunpack.c.h.b16 %v196
    %v849 = vunpack.c.l.b16 %v197
    %v850 = vunpack.c.h.b16 %v197
    %v851 = vunpack.c.l.b16 %v198
    %v852 = vunpack.c.h.b16 %v198
    %v853 = vunpack.c.l.b16 %v199
    %v854 = vunpack.c.h.b16 %v199
    %v855 = vunpack.c.l.b16 %v200
    %v856 = vunpack.c.h.b16 %v200
    %v857 = vunpack.c.l.b16 %v201
    %v858 = vunpack.c.h.b16 %v201
    %v859 = vunpack.c.l.b16 %v202
    %v860 = vunpack.c.h.b16 %v202
    %v861 = vunpack.c.l.b16 %v203
    %v862 = vunpack.c.h.b16 %v203
    %v863 = vunpack.c.l.b16 %v204
    %v864 = vunpack.c.h.b16 %v204
    %v865 = vunpack.c.l.b16 %v205
    %v866 = vunpack.c.h.b16 %v205
    %v867 = vunpack.c.l.b16 %v206
    %v868 = vunpack.c.h.b16 %v206
    %v869 = vunpack.c.l.b16 %v207
    %v870 = vunpack.c.h.b16 %v207
    %v871 = vunpack.c.l.b16 %v208
    %v872 = vunpack.c.h.b16 %v208
    %v873 = vunpack.c.l.b16 %v209
    %v874 = vunpack.c.h.b16 %v209
    %v875 = vunpack.c.l.b16 %v210
    %v876 = vunpack.c.h.b16 %v210
    %v877 = vunpack.c.l.b16 %v211
    %v878 = vunpack.c.h.b16 %v211
    %v879 = vunpack.c.l.b16 %v212
    %v880 = vunpack.c.h.b16 %v212
    %v881 = vunpack.c.l.b16 %v213
    %v882 = vunpack.c.h.b16 %v213
    %v883 = vunpack.c.l.b16 %v214
    %v884 = vunpack.c.h.b16 %v214
    %v885 = vunpack.c.l.b16 %v215
    %v886 = vunpack.c.h.b16 %v215
    %v887 = vunpack.c.l.b16 %v216
    %v888 = vunpack.c.h.b16 %v216
    %v889 = vunpack.c.l.b16 %v217
    %v890 = vunpack.c.h.b16 %v217
    %v891 = vunpack.c.l.b16 %v218
    %v892 = vunpack.c.h.b16 %v218
    %v893 = vunpack.c.l.b16 %v219
    %v894 = vunpack.c.h.b16 %v219
    %v895 = vunpack.c.l.b16 %v220
    %v896 = vunpack.c.h.b16 %v220
    %v897 = vunpack.c.l.b16 %v221
    %v898 = vunpack.c.h.b16 %v221
    %v899 = vunpack.c.l.b16 %v222
    %v900 = vunpack.c.h.b16 %v222
    %v901 = vunpack.c.l.b16 %v223
    %v902 = vunpack.c.h.b16 %v223
    %v903 = vunpack.c.l.b16 %v224
    %v904 = vunpack.c.h.b16 %v224
    %v905 = vunpack.c.l.b16 %v225
    %v906 = vunpack.c.h.b16 %v225
    %v907 = vunpack.c.l.b16 %v226
    %v908 = vunpack.c.h.b16 %v226
    %v909 = vunpack.c.l.b16 %v227
    %v910 = vunpack.c.h.b16 %v227
    %v911 = vunpack.c.l.b16 %v228
    %v912 = vunpack.c.h.b16 %v228
    %v913 = vunpack.c.l.b16 %v229
    %v914 = vunpack.c.h.b16 %v229
    %v915 = vunpack.c.l.b16 %v230
    %v916 = vunpack.c.h.b16 %v230
    %v917 = vunpack.c.l.b16 %v231
    %v918 = vunpack.c.h.b16 %v231
    %v919 = vunpack.c.l.b16 %v232
    %v920 = vunpack.c.h.b16 %v232
    %v921 = vunpack.c.l.b16 %v233
    %v922 = vunpack.c.h.b16 %v233
    %v923 = vunpack.c.l.b16 %v234
    %v924 = vunpack.c.h.b16 %v234
    %v925 = vunpack.c.l.b16 %v235
    %v926 = vunpack.c.h.b16 %v235
    %v927 = vunpack.c.l.b16 %v236
    %v928 = vunpack.c.h.b16 %v236
    %v929 = vunpack.c.l.b16 %v237
    %v930 = vunpack.c.h.b16 %v237
    %v931 = vunpack.c.l.b16 %v238
    %v932 = vunpack.c.h.b16 %v238
    %v933 = vunpack.c.l.b16 %v239
    %v934 = vunpack.c.h.b16 %v239
    %v935 = vunpack.c.l.b16 %v240
    %v936 = vunpack.c.h.b16 %v240
    %v937 = vunpack.c.l.b16 %v241
    %v938 = vunpack.c.h.b16 %v241
    %v939 = vunpack.c.l.b16 %v242
    %v940 = vunpack.c.h.b16 %v242
    %v941 = vunpack.c.l.b16 %v243
    %v942 = vunpack.c.h.b16 %v243
    %v943 = vunpack.c.l.b16 %v244
    %v944 = vunpack.c.h.b16 %v244
    %v945 = vunpack.c.l.b16 %v245
    %v946 = vunpack.c.h.b16 %v245
    %v947 = vunpack.c.l.b16 %v246
    %v948 = vunpack.c.h.b16 %v246
    %v949 = vunpack.c.l.b16 %v247
    %v950 = vunpack.c.h.b16 %v247
    %v951 = vunpack.c.l.b16 %v248
    %v952 = vunpack.c.h.b16 %v248
    %v953 = vunpack.c.l.b16 %v249
    %v954 = vunpack.c.h.b16 %v249
    %v955 = vunpack.c.l.b16 %v250
    %v956 = vunpack.c.h.b16 %v250
    %v957 = vunpack.c.l.b16 %v251
    %v958 = vunpack.c.h.b16 %v251
    %v959 = vunpack.c.l.b16 %v252
    %v960 = vunpack.c.h.b16 %v252
    %v961 = vunpack.c.l.b16 %v253
    %v962 = vunpack.c.h.b16 %v253
    %v963 = vunpack.c.l.b16 %v254
    %v964 = vunpack.c.h.b16 %v254
    %v965 = vunpack.c.l.b16 %v255
    %v966 = vunpack.c.h.b16 %v255
    %v967 = vunpack.c.l.b16 %v256
    %v968 = vunpack.c.h.b16 %v256
    %v969 = vunpack.c.l.b16 %v257
    %v970 = vunpack.c.h.b16 %v257
    %v971 = vunpack.c.l.b16 %v258
    %v972 = vunpack.c.h.b16 %v258
    %v973 = vunpack.c.l.b16 %v259
    %v974 = vunpack.c.h.b16 %v259
    %v975 = vunpack.c.l.b16 %v260
    %v976 = vunpack.c.h.b16 %v260
    %v977 = vunpack.c.l.b16 %v261
    %v978 = vunpack.c.h.b16 %v261
    %v979 = vunpack.c.l.b16 %v262
    %v980 = vunpack.c.h.b16 %v262
    %v981 = vunpack.c.l.b16 %v263
    %v982 = vunpack.c.h.b16 %v263
    %v983 = vunpack.c.l.b16 %v264
    %v984 = vunpack.c.h.b16 %v264
    %v985 = vunpack.c.l.b16 %v265
    %v986 = vunpack.c.h.b16 %v265
    %v987 = vunpack.c.l.b16 %v266
    %v988 = vunpack.c.h.b16 %v266
    %v989 = vunpack.c.l.b16 %v267
    %v990 = vunpack.c.h.b16 %v267
    %v991 = vunpack.c.l.b16 %v268
    %v992 = vunpack.c.h.b16 %v268
    %v993 = vunpack.c.l.b16 %v269
    %v994 = vunpack.c.h.b16 %v269
    %v995 = vunpack.c.l.b16 %v270
    %v996 = vunpack.c.h.b16 %v270
    %v997 = vunpack.c.l.b16 %v271
    %v998 = vunpack.c.h.b16 %v271
    %v999 = vunpack.c.l.b16 %v272
    %v1000 = vunpack.c.h.b16 %v272
    %v1001 = vunpack.c.l.b16 %v273
    %v1002 = vunpack.c.h.b16 %v273
    %v1003 = vunpack.c.l.b16 %v274
    %v1004 = vunpack.c.h.b16 %v274
    %v1005 = vunpack.c.l.b16 %v275
    %v1006 = vunpack.c.h.b16 %v275
    %v1007 = vunpack.c.l.b16 %v276
    %v1008 = vunpack.c.h.b16 %v276
    %v1009 = vunpack.c.l.b16 %v277
    %v1010 = vunpack.c.h.b16 %v277
    %v1011 = vunpack.c.l.b16 %v278
    %v1012 = vunpack.c.h.b16 %v278
    %v1013 = vunpack.c.l.b16 %v279
    %v1014 = vunpack.c.h.b16 %v279
    %v1015 = vunpack.c.l.b16 %v280
    %v1016 = vunpack.c.h.b16 %v280
    %v1017 = vunpack.c.l.b16 %v281
    %v1018 = vunpack.c.h.b16 %v281
    %v1019 = vunpack.c.l.b16 %v282
    %v1020 = vunpack.c.h.b16 %v282
    %v1021 = vunpack.c.l.b16 %v283
    %v1022 = vunpack.c.h.b16 %v283
    %v1023 = vunpack.c.l.b16 %v284
    %v1024 = vunpack.c.h.b16 %v284
    %v1025 = vunpack.c.l.b16 %v285
    %v1026 = vunpack.c.h.b16 %v285
    %v1027 = vunpack.c.l.b16 %v286
    %v1028 = vunpack.c.h.b16 %v286
    %v1029 = vunpack.c.l.b16 %v287
    %v1030 = vunpack.c.h.b16 %v287
    %v1031 = vunpack.c.l.b16 %v288
    %v1032 = vunpack.c.h.b16 %v288
    %v1033 = vunpack.c.l.b16 %v289
    %v1034 = vunpack.c.h.b16 %v289
    %v1035 = vunpack.c.l.b16 %v290
    %v1036 = vunpack.c.h.b16 %v290
    %v1037 = vunpack.c.l.b16 %v291
    %v1038 = vunpack.c.h.b16 %v291
    %v1039 = vunpack.c.l.b16 %v292
    %v1040 = vunpack.c.h.b16 %v292
    %v1041 = vunpack.c.l.b16 %v293
    %v1042 = vunpack.c.h.b16 %v293
    %v1043 = vunpack.c.l.b16 %v294
    %v1044 = vunpack.c.h.b16 %v294
    %v1045 = vunpack.c.l.b16 %v295
    %v1046 = vunpack.c.h.b16 %v295
    %v1047 = vunpack.c.l.b16 %v296
    %v1048 = vunpack.c.h.b16 %v296
    %v1049 = vunpack.c.l.b16 %v297
    %v1050 = vunpack.c.h.b16 %v297
    %v1051 = vunpack.c.l.b16 %v298
    %v1052 = vunpack.c.h.b16 %v298
    %v1053 = vunpack.c.l.b16 %v299
    %v1054 = vunpack.c.h.b16 %v299
    %v1055 = vunpack.c.l.b16 %v300
    %v1056 = vunpack.c.h.b16 %v300
    %v1057 = vunpack.c.l.b16 %v301
    %v1058 = vunpack.c.h.b16 %v301
    %v1059 = vunpack.c.l.b16 %v302
    %v1060 = vunpack.c.h.b16 %v302
    %v1061 = vunpack.c.l.b16 %v303
    %v1062 = vunpack.c.h.b16 %v303
    %v1063 = vunpack.c.l.b16 %v304
    %v1064 = vunpack.c.h.b16 %v304
    %v1065 = vunpack.c.l.b16 %v305
    %v1066 = vunpack.c.h.b16 %v305
    %v1067 = vunpack.c.l.b16 %v306
    %v1068 = vunpack.c.h.b16 %v306
    %v1069 = vunpack.c.l.b16 %v307
    %v1070 = vunpack.c.h.b16 %v307
    %v1071 = vunpack.c.l.b16 %v308
    %v1072 = vunpack.c.h.b16 %v308
    %v1073 = vunpack.c.l.b16 %v309
    %v1074 = vunpack.c.h.b16 %v309
    %v1075 = vunpack.c.l.b16 %v310
    %v1076 = vunpack.c.h.b16 %v310
    %v1077 = vunpack.c.l.b16 %v311
    %v1078 = vunpack.c.h.b16 %v311
    %v1079 = vunpack.c.l.b16 %v312
    %v1080 = vunpack.c.h.b16 %v312
    %v1081 = vunpack.c.l.b16 %v313
    %v1082 = vunpack.c.h.b16 %v313
    %v1083 = vunpack.c.l.b16 %v314
    %v1084 = vunpack.c.h.b16 %v314
    %v1085 = vunpack.c.l.b16 %v315
    %v1086 = vunpack.c.h.b16 %v315
    %v1087 = vunpack.c.l.b16 %v316
    %v1088 = vunpack.c.h.b16 %v316
    %v1089 = vunpack.c.l.b16 %v317
    %v1090 = vunpack.c.h.b16 %v317
    %v1091 = vunpack.c.l.b16 %v318
    %v1092 = vunpack.c.h.b16 %v318
    %v1093 = vunpack.c.l.b16 %v319
    %v1094 = vunpack.c.h.b16 %v319
    %v1095 = vunpack.c.l.b16 %v320
    %v1096 = vunpack.c.h.b16 %v320
    %v1097 = vunpack.c.l.b16 %v321
    %v1098 = vunpack.c.h.b16 %v321
    %v1099 = vunpack.c.l.b16 %v322
    %v1100 = vunpack.c.h.b16 %v322
    %v1101 = vunpack.c.l.b16 %v323
    %v1102 = vunpack.c.h.b16 %v323
    %v1103 = vunpack.c.l.b16 %v324
    %v1104 = vunpack.c.h.b16 %v324
    %v1105 = vunpack.c.l.b16 %v325
    %v1106 = vunpack.c.h.b16 %v325
    %v1107 = vunpack.c.l.b16 %v326
    %v1108 = vunpack.c.h.b16 %v326
    %v1109 = vunpack.c.l.b16 %v327
    %v1110 = vunpack.c.h.b16 %v327
    %v1111 = vunpack.c.l.b16 %v328
    %v1112 = vunpack.c.h.b16 %v328
    %v1113 = vunpack.c.l.b16 %v329
    %v1114 = vunpack.c.h.b16 %v329
    %v1115 = vunpack.c.l.b16 %v330
    %v1116 = vunpack.c.h.b16 %v330
    %v1117 = vunpack.c.l.b16 %v331
    %v1118 = vunpack.c.h.b16 %v331
    %v1119 = vunpack.c.l.b16 %v332
    %v1120 = vunpack.c.h.b16 %v332
    %v1121 = vunpack.c.l.b16 %v333
    %v1122 = vunpack.c.h.b16 %v333
    %v1123 = vunpack.c.l.b16 %v334
    %v1124 = vunpack.c.h.b16 %v334
    %v1125 = vpack.c.b16 %v617, %v613
    %v1126 = vpack.c.b16 %v618, %v614
    %v1127 = vpack.c.b16 %v619, %v615
    %v1128 = vpack.c.b16 %v620, %v616
    %v1129 = vpack.c.b16 %v625, %v621
    %v1130 = vpack.c.b16 %v626, %v622
    %v1131 = vpack.c.b16 %v627, %v623
    %v1132 = vpack.c.b16 %v628, %v624
    %v1133 = vpack.c.b16 %v633, %v629
    %v1134 = vpack.c.b16 %v634, %v630
    %v1135 = vpack.c.b16 %v635, %v631
    %v1136 = vpack.c.b16 %v636, %v632
    %v1137 = vpack.c.b16 %v641, %v637
    %v1138 = vpack.c.b16 %v642, %v638
    %v1139 = vpack.c.b16 %v643, %v639
    %v1140 = vpack.c.b16 %v644, %v640
    %v1141 = vpack.c.b16 %v649, %v645
    %v1142 = vpack.c.b16 %v650, %v646
    %v1143 = vpack.c.b16 %v651, %v647
    %v1144 = vpack.c.b16 %v652, %v648
    %v1145 = vpack.c.b16 %v657, %v653
    %v1146 = vpack.c.b16 %v658, %v654
    %v1147 = vpack.c.b16 %v659, %v655
    %v1148 = vpack.c.b16 %v660, %v656
    %v1149 = vpack.c.b16 %v665, %v661
    %v1150 = vpack.c.b16 %v666, %v662
    %v1151 = vpack.c.b16 %v667, %v663
    %v1152 = vpack.c.b16 %v668, %v664
    %v1153 = vpack.c.b16 %v673, %v669
    %v1154 = vpack.c.b16 %v674, %v670
    %v1155 = vpack.c.b16 %v675, %v671
    %v1156 = vpack.c.b16 %v676, %v672
    %v1157 = vpack.c.b16 %v681, %v677
    %v1158 = vpack.c.b16 %v682, %v678
    %v1159 = vpack.c.b16 %v683, %v679
    %v1160 = vpack.c.b16 %v684, %v680
    %v1161 = vpack.c.b16 %v689, %v685
    %v1162 = vpack.c.b16 %v690, %v686
    %v1163 = vpack.c.b16 %v691, %v687
    %v1164 = vpack.c.b16 %v692, %v688
    %v1165 = vpack.c.b16 %v697, %v693
    %v1166 = vpack.c.b16 %v698, %v694
    %v1167 = vpack.c.b16 %v699, %v695
    %v1168 = vpack.c.b16 %v700, %v696
    %v1169 = vpack.c.b16 %v705, %v701
    %v1170 = vpack.c.b16 %v706, %v702
    %v1171 = vpack.c.b16 %v707, %v703
    %v1172 = vpack.c.b16 %v708, %v704
    %v1173 = vpack.c.b16 %v713, %v709
    %v1174 = vpack.c.b16 %v714, %v710
    %v1175 = vpack.c.b16 %v715, %v711
    %v1176 = vpack.c.b16 %v716, %v712
    %v1177 = vpack.c.b16 %v721, %v717
    %v1178 = vpack.c.b16 %v722, %v718
    %v1179 = vpack.c.b16 %v723, %v719
    %v1180 = vpack.c.b16 %v724, %v720
    %v1181 = vpack.c.b16 %v729, %v725
    %v1182 = vpack.c.b16 %v730, %v726
    %v1183 = vpack.c.b16 %v731, %v727
    %v1184 = vpack.c.b16 %v732, %v728
    %v1185 = vpack.c.b16 %v737, %v733
    %v1186 = vpack.c.b16 %v738, %v734
    %v1187 = vpack.c.b16 %v739, %v735
    %v1188 = vpack.c.b16 %v740, %v736
    %v1189 = vpack.c.b16 %v745, %v741
    %v1190 = vpack.c.b16 %v746, %v742
    %v1191 = vpack.c.b16 %v747, %v743
    %v1192 = vpack.c.b16 %v748, %v744
    %v1193 = vpack.c.b16 %v753, %v749
    %v1194 = vpack.c.b16 %v754, %v750
    %v1195 = vpack.c.b16 %v755, %v751
    %v1196 = vpack.c.b16 %v756, %v752
    %v1197 = vpack.c.b16 %v761, %v757
    %v1198 = vpack.c.b16 %v762, %v758
    %v1199 = vpack.c.b16 %v763, %v759
    %v1200 = vpack.c.b16 %v764, %v760
    %v1201 = vpack.c.b16 %v769, %v765
    %v1202 = vpack.c.b16 %v770, %v766
    %v1203 = vpack.c.b16 %v771, %v767
    %v1204 = vpack.c.b16 %v772, %v768
    %v1205 = vpack.c.b16 %v777, %v773
    %v1206 = vpack.c.b16 %v778, %v774
    %v1207 = vpack.c.b16 %v779, %v775
    %v1208 = vpack.c.b16 %v780, %v776
    %v1209 = vpack.c.b16 %v785, %v781
    %v1210 = vpack.c.b16 %v786, %v782
    %v1211 = vpack.c.b16 %v787, %v783
    %v1212 = vpack.c.b16 %v788, %v784
    %v1213 = vpack.c.b16 %v793, %v789
    %v1214 = vpack.c.b16 %v794, %v790
    %v1215 = vpack.c.b16 %v795, %v791
    %v1216 = vpack.c.b16 %v796, %v792
    %v1217 = vpack.c.b16 %v801, %v797
    %v1218 = vpack.c.b16 %v802, %v798
    %v1219 = vpack.c.b16 %v803, %v799
    %v1220 = vpack.c.b16 %v804, %v800
    %v1221 = vpack.c.b16 %v809, %v805
    %v1222 = vpack.c.b16 %v810, %v806
    %v1223 = vpack.c.b16 %v811, %v807
    %v1224 = vpack.c.b16 %v812, %v808
    %v1225 = vpack.c.b16 %v817, %v813
    %v1226 = vpack.c.b16 %v818, %v814
    %v1227 = vpack.c.b16 %v819, %v815
    %v1228 = vpack.c.b16 %v820, %v816
    %v1229 = vpack.c.b16 %v825, %v821
    %v1230 = vpack.c.b16 %v826, %v822
    %v1231 = vpack.c.b16 %v827, %v823
    %v1232 = vpack.c.b16 %v828, %v824
    %v1233 = vpack.c.b16 %v833, %v829
    %v1234 = vpack.c.b16 %v834, %v830
    %v1235 = vpack.c.b16 %v835, %v831
    %v1236 = vpack.c.b16 %v836, %v832
    %v1237 = vpack.c.b16 %v841, %v837
    %v1238 = vpack.c.b16 %v842, %v838
    %v1239 = vpack.c.b16 %v843, %v839
    %v1240 = vpack.c.b16 %v844, %v840
    %v1241 = vpack.c.b16 %v849, %v845
    %v1242 = vpack.c.b16 %v850, %v846
    %v1243 = vpack.c.b16 %v851, %v847
    %v1244 = vpack.c.b16 %v852, %v848
    %v1245 = vpack.c.b16 %v857, %v853
    %v1246 = vpack.c.b16 %v858, %v854
    %v1247 = vpack.c.b16 %v859, %v855
    %v1248 = vpack.c.b16 %v860, %v856
    %v1249 = vpack.c.b16 %v865, %v861
    %v1250 = vpack.c.b16 %v866, %v862
    %v1251 = vpack.c.b16 %v867, %v863
    %v1252 = vpack.c.b16 %v868, %v864
    %v1253 = vpack.c.b16 %v873, %v869
    %v1254 = vpack.c.b16 %v874, %v870
    %v1255 = vpack.c.b16 %v875, %v871
    %v1256 = vpack.c.b16 %v876, %v872
    %v1257 = vpack.c.b16 %v881, %v877
    %v1258 = vpack.c.b16 %v882, %v878
    %v1259 = vpack.c.b16 %v883, %v879
    %v1260 = vpack.c.b16 %v884, %v880
    %v1261 = vpack.c.b16 %v889, %v885
    %v1262 = vpack.c.b16 %v890, %v886
    %v1263 = vpack.c.b16 %v891, %v887
    %v1264 = vpack.c.b16 %v892, %v888
    %v1265 = vpack.c.b16 %v897, %v893
    %v1266 = vpack.c.b16 %v898, %v894
    %v1267 = vpack.c.b16 %v899, %v895
    %v1268 = vpack.c.b16 %v900, %v896
    %v1269 = vpack.c.b16 %v905, %v901
    %v1270 = vpack.c.b16 %v906, %v902
    %v1271 = vpack.c.b16 %v907, %v903
    %v1272 = vpack.c.b16 %v908, %v904
    %v1273 = vpack.c.b16 %v913, %v909
    %v1274 = vpack.c.b16 %v914, %v910
    %v1275 = vpack.c.b16 %v915, %v911
    %v1276 = vpack.c.b16 %v916, %v912
    %v1277 = vpack.c.b16 %v921, %v917
    %v1278 = vpack.c.b16 %v922, %v918
    %v1279 = vpack.c.b16 %v923, %v919
    %v1280 = vpack.c.b16 %v924, %v920
    %v1281 = vpack.c.b16 %v929, %v925
    %v1282 = vpack.c.b16 %v930, %v926
    %v1283 = vpack.c.b16 %v931, %v927
    %v1284 = vpack.c.b16 %v932, %v928
    %v1285 = vpack.c.b16 %v937, %v933
    %v1286 = vpack.c.b16 %v938, %v934
    %v1287 = vpack.c.b16 %v939, %v935
    %v1288 = vpack.c.b16 %v940, %v936
    %v1289 = vpack.c.b16 %v945, %v941
    %v1290 = vpack.c.b16 %v946, %v942
    %v1291 = vpack.c.b16 %v947, %v943
    %v1292 = vpack.c.b16 %v948, %v944
    %v1293 = vpack.c.b16 %v953, %v949
    %v1294 = vpack.c.b16 %v954, %v950
    %v1295 = vpack.c.b16 %v955, %v951
    %v1296 = vpack.c.b16 %v956, %v952
    %v1297 = vpack.c.b16 %v961, %v957
    %v1298 = vpack.c.b16 %v962, %v958
    %v1299 = vpack.c.b16 %v963, %v959
    %v1300 = vpack.c.b16 %v964, %v960
    %v1301 = vpack.c.b16 %v969, %v965
    %v1302 = vpack.c.b16 %v970, %v966
    %v1303 = vpack.c.b16 %v971, %v967
    %v1304 = vpack.c.b16 %v972, %v968
    %v1305 = vpack.c.b16 %v977, %v973
    %v1306 = vpack.c.b16 %v978, %v974
    %v1307 = vpack.c.b16 %v979, %v975
    %v1308 = vpack.c.b16 %v980, %v976
    %v1309 = vpack.c.b16 %v985, %v981
    %v1310 = vpack.c.b16 %v986, %v982
    %v1311 = vpack.c.b16 %v987, %v983
    %v1312 = vpack.c.b16 %v988, %v984
    %v1313 = vpack.c.b16 %v993, %v989
    %v1314 = vpack.c.b16 %v994, %v990
    %v1315 = vpack.c.b16 %v995, %v991
    %v1316 = vpack.c.b16 %v996, %v992
    %v1317 = vpack.c.b16 %v1001, %v997
    %v1318 = vpack.c.b16 %v1002, %v998
    %v1319 = vpack.c.b16 %v1003, %v999
    %v1320 = vpack.c.b16 %v1004, %v1000
    %v1321 = vpack.c.b16 %v1009, %v1005
    %v1322 = vpack.c.b16 %v1010, %v1006
    %v1323 = vpack.c.b16 %v1011, %v1007
    %v1324 = vpack.c.b16 %v1012, %v1008
    %v1325 = vpack.c.b16 %v1017, %v1013
    %v1326 = vpack.c.b16 %v1018, %v1014
    %v1327 = vpack.c.b16 %v1019, %v1015
    %v1328 = vpack.c.b16 %v1020, %v1016
    %v1329 = vpack.c.b16 %v1025, %v1021
    %v1330 = vpack.c.b16 %v1026, %v1022
    %v1331 = vpack.c.b16 %v1027, %v1023
    %v1332 = vpack.c.b16 %v1028, %v1024
    %v1333 = vpack.c.b16 %v1033, %v1029
    %v1334 = vpack.c.b16 %v1034, %v1030
    %v1335 = vpack.c.b16 %v1035, %v1031
    %v1336 = vpack.c.b16 %v1036, %v1032
    %v1337 = vpack.c.b16 %v1041, %v1037
    %v1338 = vpack.c.b16 %v1042, %v1038
    %v1339 = vpack.c.b16 %v1043, %v1039
    %v1340 = vpack.c.b16 %v1044, %v1040
    %v1341 = vpack.c.b16 %v1049, %v1045
    %v1342 = vpack.c.b16 %v1050, %v1046
    %v1343 = vpack.c.b16 %v1051, %v1047
    %v1344 = vpack.c.b16 %v1052, %v1048
    %v1345 = vpack.c.b16 %v1057, %v1053
    %v1346 = vpack.c.b16 %v1058, %v1054
    %v1347 = vpack.c.b16 %v1059, %v1055
    %v1348 = vpack.c.b16 %v1060, %v1056
    %v1349 = vpack.c.b16 %v1065, %v1061
    %v1350 = vpack.c.b16 %v1066, %v1062
    %v1351 = vpack.c.b16 %v1067, %v1063
    %v1352 = vpack.c.b16 %v1068, %v1064
    %v1353 = vpack.c.b16 %v1073, %v1069
    %v1354 = vpack.c.b16 %v1074, %v1070
    %v1355 = vpack.c.b16 %v1075, %v1071
    %v1356 = vpack.c.b16 %v1076, %v1072
    %v1357 = vpack.c.b16 %v1081, %v1077
    %v1358 = vpack.c.b16 %v1082, %v1078
    %v1359 = vpack.c.b16 %v1083, %v1079
    %v1360 = vpack.c.b16 %v1084, %v1080
    %v1361 = vpack.c.b16 %v1089, %v1085
    %v1362 = vpack.c.b16 %v1090, %v1086
    %v1363 = vpack.c.b16 %v1091, %v1087
    %v1364 = vpack.c.b16 %v1092, %v1088
    %v1365 = vpack.c.b16 %v1097, %v1093
    %v1366 = vpack.c.b16 %v1098, %v1094
    %v1367 = vpack.c.b16 %v1099, %v1095
    %v1368 = vpack.c.b16 %v1100, %v1096
    %v1369 = vpack.c.b16 %v1105, %v1101
    %v1370 = vpack.c.b16 %v1106, %v1102
    %v1371 = vpack.c.b16 %v1107, %v1103
    %v1372 = vpack.c.b16 %v1108, %v1104
    %v1373 = vpack.c.b16 %v1113, %v1109
    %v1374 = vpack.c.b16 %v1114, %v1110
    %v1375 = vpack.c.b16 %v1115, %v1111
    %v1376 = vpack.c.b16 %v1116, %v1112
    %v1377 = vpack.c.b16 %v1121, %v1117
    %v1378 = vpack.c.b16 %v1122, %v1118
    %v1379 = vpack.c.b16 %v1123, %v1119
    %v1380 = vpack.c.b16 %v1124, %v1120
    %1637 = vmatprep.subr.bf16.mxu0 %v1126
    %1638 = vmatpush1.bf16.msra.mxu0 %v1125
    %1639 = vmatprep.subr.bf16.mxu0 %v1130
    %1640 = vmatpush1.bf16.msra.mxu0 %v1129
    %1641 = vmatprep.subr.bf16.mxu0 %v1134
    %1642 = vmatpush1.bf16.msra.mxu0 %v1133
    %1643 = vmatprep.subr.bf16.mxu0 %v1138
    %1644 = vmatpush1.bf16.msra.mxu0 %v1137
    %1645 = vmatprep.subr.bf16.mxu0 %v1142
    %1646 = vmatpush1.bf16.msra.mxu0 %v1141
    %1647 = vmatprep.subr.bf16.mxu0 %v1146
    %1648 = vmatpush1.bf16.msra.mxu0 %v1145
    %1649 = vmatprep.subr.bf16.mxu0 %v1150
    %1650 = vmatpush1.bf16.msra.mxu0 %v1149
    %1651 = vmatprep.subr.bf16.mxu0 %v1154
    %1652 = vmatpush1.bf16.msra.mxu0 %v1153
    %1653 = vmatprep.subr.bf16.mxu0 %v1158
    %1654 = vmatpush1.bf16.msra.mxu0 %v1157
    %1655 = vmatprep.subr.bf16.mxu0 %v1162
    %1656 = vmatpush1.bf16.msra.mxu0 %v1161
    %1657 = vmatprep.subr.bf16.mxu0 %v1166
    %1658 = vmatpush1.bf16.msra.mxu0 %v1165
    %1659 = vmatprep.subr.bf16.mxu0 %v1170
    %1660 = vmatpush1.bf16.msra.mxu0 %v1169
    %1661 = vmatprep.subr.bf16.mxu0 %v1174
    %1662 = vmatpush1.bf16.msra.mxu0 %v1173
    %1663 = vmatprep.subr.bf16.mxu0 %v1178
    %1664 = vmatpush1.bf16.msra.mxu0 %v1177
    %1665 = vmatprep.subr.bf16.mxu0 %v1182
    %1666 = vmatpush1.bf16.msra.mxu0 %v1181
    %1667 = vmatprep.subr.bf16.mxu0 %v1186
    %1668 = vmatpush1.bf16.msra.mxu0 %v1185
    %1669 = vmatprep.mubr.bf16.mxu0 %v72
    %1670 = vmatmul.mubr.bf16.gmra.mrb[0].mxu0 %v71
    %v1671 = vpop.f32.mrb[0].mxu0
    %v1672 = vadd.f32 %v340, %v1671
    %v1673 = vpop.f32.mrb[0].mxu0
    %v1674 = vadd.f32 %v344, %v1673
    %v1675 = vpop.f32.mrb[0].mxu0
    %v1676 = vadd.f32 %v340, %v1675
    %v1677 = vpop.f32.mrb[0].mxu0
    %v1678 = vadd.f32 %v344, %v1677
    %1679 = vdwg.mxu0
    %1680 = vmatprep.subr.bf16.mxu0 %v1190
    %1681 = vmatpush1.bf16.msra.mxu0 %v1189
    %1682 = vmatprep.subr.bf16.mxu0 %v1194
    %1683 = vmatpush1.bf16.msra.mxu0 %v1193
    %1684 = vmatprep.subr.bf16.mxu0 %v1198
    %1685 = vmatpush1.bf16.msra.mxu0 %v1197
    %1686 = vmatprep.subr.bf16.mxu0 %v1202
    %1687 = vmatpush1.bf16.msra.mxu0 %v1201
    %1688 = vmatprep.subr.bf16.mxu0 %v1206
    %1689 = vmatpush1.bf16.msra.mxu0 %v1205
    %1690 = vmatprep.subr.bf16.mxu0 %v1210
    %1691 = vmatpush1.bf16.msra.mxu0 %v1209
    %1692 = vmatprep.subr.bf16.mxu0 %v1214
    %1693 = vmatpush1.bf16.msra.mxu0 %v1213
    %1694 = vmatprep.subr.bf16.mxu0 %v1218
    %1695 = vmatpush1.bf16.msra.mxu0 %v1217
    %1696 = vmatprep.subr.bf16.mxu0 %v1222
    %1697 = vmatpush1.bf16.msra.mxu0 %v1221
    %1698 = vmatprep.subr.bf16.mxu0 %v1226
    %1699 = vmatpush1.bf16.msra.mxu0 %v1225
    %1700 = vmatprep.subr.bf16.mxu0 %v1230
    %1701 = vmatpush1.bf16.msra.mxu0 %v1229
    %1702 = vmatprep.subr.bf16.mxu0 %v1234
    %1703 = vmatpush1.bf16.msra.mxu0 %v1233
    %1704 = vmatprep.subr.bf16.mxu0 %v1238
    %1705 = vmatpush1.bf16.msra.mxu0 %v1237
    %1706 = vmatprep.subr.bf16.mxu0 %v1242
    %1707 = vmatpush1.bf16.msra.mxu0 %v1241
    %1708 = vmatprep.subr.bf16.mxu0 %v1246
    %1709 = vmatpush1.bf16.msra.mxu0 %v1245
    %1710 = vmatprep.subr.bf16.mxu0 %v1250
    %1711 = vmatpush1.bf16.msra.mxu0 %v1249
    %1712 = vmatprep.mubr.bf16.mxu0 %v74
    %1713 = vmatmul.mubr.bf16.gmra.mrb[0].mxu0 %v73
    %v1714 = vpop.f32.mrb[0].mxu0
    %v1715 = vadd.f32 %v1672, %v1714
    %v1716 = vpop.f32.mrb[0].mxu0
    %v1717 = vadd.f32 %v1674, %v1716
    %v1718 = vpop.f32.mrb[0].mxu0
    %v1719 = vadd.f32 %v1676, %v1718
    %v1720 = vpop.f32.mrb[0].mxu0
    %v1721 = vadd.f32 %v1678, %v1720
    %1722 = vdwg.mxu0
    %1723 = vmatprep.subr.bf16.mxu0 %v1254
    %1724 = vmatpush1.bf16.msra.mxu0 %v1253
    %1725 = vmatprep.subr.bf16.mxu0 %v1258
    %1726 = vmatpush1.bf16.msra.mxu0 %v1257
    %1727 = vmatprep.subr.bf16.mxu0 %v1262
    %1728 = vmatpush1.bf16.msra.mxu0 %v1261
    %1729 = vmatprep.subr.bf16.mxu0 %v1266
    %1730 = vmatpush1.bf16.msra.mxu0 %v1265
    %1731 = vmatprep.subr.bf16.mxu0 %v1270
    %1732 = vmatpush1.bf16.msra.mxu0 %v1269
    %1733 = vmatprep.subr.bf16.mxu0 %v1274
    %1734 = vmatpush1.bf16.msra.mxu0 %v1273
    %1735 = vmatprep.subr.bf16.mxu0 %v1278
    %1736 = vmatpush1.bf16.msra.mxu0 %v1277
    %1737 = vmatprep.subr.bf16.mxu0 %v1282
    %1738 = vmatpush1.bf16.msra.mxu0 %v1281
    %1739 = vmatprep.subr.bf16.mxu0 %v1286
    %1740 = vmatpush1.bf16.msra.mxu0 %v1285
    %1741 = vmatprep.subr.bf16.mxu0 %v1290
    %1742 = vmatpush1.bf16.msra.mxu0 %v1289
    %1743 = vmatprep.subr.bf16.mxu0 %v1294
    %1744 = vmatpush1.bf16.msra.mxu0 %v1293
    %1745 = vmatprep.subr.bf16.mxu0 %v1298
    %1746 = vmatpush1.bf16.msra.mxu0 %v1297
    %1747 = vmatprep.subr.bf16.mxu0 %v1302
    %1748 = vmatpush1.bf16.msra.mxu0 %v1301
    %1749 = vmatprep.subr.bf16.mxu0 %v1306
    %1750 = vmatpush1.bf16.msra.mxu0 %v1305
    %1751 = vmatprep.subr.bf16.mxu0 %v1310
    %1752 = vmatpush1.bf16.msra.mxu0 %v1309
    %1753 = vmatprep.subr.bf16.mxu0 %v1314
    %1754 = vmatpush1.bf16.msra.mxu0 %v1313
    %1755 = vmatprep.mubr.bf16.mxu0 %v76
    %1756 = vmatmul.mubr.bf16.gmra.mrb[0].mxu0 %v75
    %v1757 = vpop.f32.mrb[0].mxu0
    %v1758 = vadd.f32 %v1715, %v1757
    %v1759 = vpop.f32.mrb[0].mxu0
    %v1760 = vadd.f32 %v1717, %v1759
    %v1761 = vpop.f32.mrb[0].mxu0
    %v1762 = vadd.f32 %v1719, %v1761
    %v1763 = vpop.f32.mrb[0].mxu0
    %v1764 = vadd.f32 %v1721, %v1763
    %1765 = vdwg.mxu0
    %1766 = vmatprep.subr.bf16.mxu0 %v1318
    %1767 = vmatpush1.bf16.msra.mxu0 %v1317
    %1768 = vmatprep.subr.bf16.mxu0 %v1322
    %1769 = vmatpush1.bf16.msra.mxu0 %v1321
    %1770 = vmatprep.subr.bf16.mxu0 %v1326
    %1771 = vmatpush1.bf16.msra.mxu0 %v1325
    %1772 = vmatprep.subr.bf16.mxu0 %v1330
    %1773 = vmatpush1.bf16.msra.mxu0 %v1329
    %1774 = vmatprep.subr.bf16.mxu0 %v1334
    %1775 = vmatpush1.bf16.msra.mxu0 %v1333
    %1776 = vmatprep.subr.bf16.mxu0 %v1338
    %1777 = vmatpush1.bf16.msra.mxu0 %v1337
    %1778 = vmatprep.subr.bf16.mxu0 %v1342
    %1779 = vmatpush1.bf16.msra.mxu0 %v1341
    %1780 = vmatprep.subr.bf16.mxu0 %v1346
    %1781 = vmatpush1.bf16.msra.mxu0 %v1345
    %1782 = vmatprep.subr.bf16.mxu0 %v1350
    %1783 = vmatpush1.bf16.msra.mxu0 %v1349
    %1784 = vmatprep.subr.bf16.mxu0 %v1354
    %1785 = vmatpush1.bf16.msra.mxu0 %v1353
    %1786 = vmatprep.subr.bf16.mxu0 %v1358
    %1787 = vmatpush1.bf16.msra.mxu0 %v1357
    %1788 = vmatprep.subr.bf16.mxu0 %v1362
    %1789 = vmatpush1.bf16.msra.mxu0 %v1361
    %1790 = vmatprep.subr.bf16.mxu0 %v1366
    %1791 = vmatpush1.bf16.msra.mxu0 %v1365
    %1792 = vmatprep.subr.bf16.mxu0 %v1370
    %1793 = vmatpush1.bf16.msra.mxu0 %v1369
    %1794 = vmatprep.subr.bf16.mxu0 %v1374
    %1795 = vmatpush1.bf16.msra.mxu0 %v1373
    %1796 = vmatprep.subr.bf16.mxu0 %v1378
    %1797 = vmatpush1.bf16.msra.mxu0 %v1377
    %1798 = vmatprep.mubr.bf16.mxu0 %v78
    %1799 = vmatmul.mubr.bf16.gmra.mrb[0].mxu0 %v77
    %v1800 = vpop.f32.mrb[0].mxu0
    %v1801 = vadd.f32 %v1758, %v1800
    %v1802 = vpop.f32.mrb[0].mxu0
    %v1803 = vadd.f32 %v1760, %v1802
    %v1804 = vpop.f32.mrb[0].mxu0
    %v1805 = vadd.f32 %v1762, %v1804
    %v1806 = vpop.f32.mrb[0].mxu0
    %v1807 = vadd.f32 %v1764, %v1806
    %1808 = vdwg.mxu0
    %1809 = vmatprep.subr.bf16.mxu0 %v1128
    %1810 = vmatpush1.bf16.msra.mxu0 %v1127
    %1811 = vmatprep.subr.bf16.mxu0 %v1132
    %1812 = vmatpush1.bf16.msra.mxu0 %v1131
    %1813 = vmatprep.subr.bf16.mxu0 %v1136
    %1814 = vmatpush1.bf16.msra.mxu0 %v1135
    %1815 = vmatprep.subr.bf16.mxu0 %v1140
    %1816 = vmatpush1.bf16.msra.mxu0 %v1139
    %1817 = vmatprep.subr.bf16.mxu0 %v1144
    %1818 = vmatpush1.bf16.msra.mxu0 %v1143
    %1819 = vmatprep.subr.bf16.mxu0 %v1148
    %1820 = vmatpush1.bf16.msra.mxu0 %v1147
    %1821 = vmatprep.subr.bf16.mxu0 %v1152
    %1822 = vmatpush1.bf16.msra.mxu0 %v1151
    %1823 = vmatprep.subr.bf16.mxu0 %v1156
    %1824 = vmatpush1.bf16.msra.mxu0 %v1155
    %1825 = vmatprep.subr.bf16.mxu0 %v1160
    %1826 = vmatpush1.bf16.msra.mxu0 %v1159
    %1827 = vmatprep.subr.bf16.mxu0 %v1164
    %1828 = vmatpush1.bf16.msra.mxu0 %v1163
    %1829 = vmatprep.subr.bf16.mxu0 %v1168
    %1830 = vmatpush1.bf16.msra.mxu0 %v1167
    %1831 = vmatprep.subr.bf16.mxu0 %v1172
    %1832 = vmatpush1.bf16.msra.mxu0 %v1171
    %1833 = vmatprep.subr.bf16.mxu0 %v1176
    %1834 = vmatpush1.bf16.msra.mxu0 %v1175
    %1835 = vmatprep.subr.bf16.mxu0 %v1180
    %1836 = vmatpush1.bf16.msra.mxu0 %v1179
    %1837 = vmatprep.subr.bf16.mxu0 %v1184
    %1838 = vmatpush1.bf16.msra.mxu0 %v1183
    %1839 = vmatprep.subr.bf16.mxu0 %v1188
    %1840 = vmatpush1.bf16.msra.mxu0 %v1187
    %1841 = vmatprep.mubr.bf16.mxu0 %v72
    %1842 = vmatmul.mubr.bf16.gmra.mrb[0].mxu0 %v71
    %v1843 = vpop.f32.mrb[0].mxu0
    %v1844 = vadd.f32 %v348, %v1843
    %v1845 = vpop.f32.mrb[0].mxu0
    %v1846 = vadd.f32 %v352, %v1845
    %v1847 = vpop.f32.mrb[0].mxu0
    %v1848 = vadd.f32 %v348, %v1847
    %v1849 = vpop.f32.mrb[0].mxu0
    %v1850 = vadd.f32 %v352, %v1849
    %1851 = vdwg.mxu0
    %1852 = vmatprep.subr.bf16.mxu0 %v1192
    %1853 = vmatpush1.bf16.msra.mxu0 %v1191
    %1854 = vmatprep.subr.bf16.mxu0 %v1196
    %1855 = vmatpush1.bf16.msra.mxu0 %v1195
    %1856 = vmatprep.subr.bf16.mxu0 %v1200
    %1857 = vmatpush1.bf16.msra.mxu0 %v1199
    %1858 = vmatprep.subr.bf16.mxu0 %v1204
    %1859 = vmatpush1.bf16.msra.mxu0 %v1203
    %1860 = vmatprep.subr.bf16.mxu0 %v1208
    %1861 = vmatpush1.bf16.msra.mxu0 %v1207
    %1862 = vmatprep.subr.bf16.mxu0 %v1212
    %1863 = vmatpush1.bf16.msra.mxu0 %v1211
    %1864 = vmatprep.subr.bf16.mxu0 %v1216
    %1865 = vmatpush1.bf16.msra.mxu0 %v1215
    %1866 = vmatprep.subr.bf16.mxu0 %v1220
    %1867 = vmatpush1.bf16.msra.mxu0 %v1219
    %1868 = vmatprep.subr.bf16.mxu0 %v1224
    %1869 = vmatpush1.bf16.msra.mxu0 %v1223
    %1870 = vmatprep.subr.bf16.mxu0 %v1228
    %1871 = vmatpush1.bf16.msra.mxu0 %v1227
    %1872 = vmatprep.subr.bf16.mxu0 %v1232
    %1873 = vmatpush1.bf16.msra.mxu0 %v1231
    %1874 = vmatprep.subr.bf16.mxu0 %v1236
    %1875 = vmatpush1.bf16.msra.mxu0 %v1235
    %1876 = vmatprep.subr.bf16.mxu0 %v1240
    %1877 = vmatpush1.bf16.msra.mxu0 %v1239
    %1878 = vmatprep.subr.bf16.mxu0 %v1244
    %1879 = vmatpush1.bf16.msra.mxu0 %v1243
    %1880 = vmatprep.subr.bf16.mxu0 %v1248
    %1881 = vmatpush1.bf16.msra.mxu0 %v1247
    %1882 = vmatprep.subr.bf16.mxu0 %v1252
    %1883 = vmatpush1.bf16.msra.mxu0 %v1251
    %1884 = vmatprep.mubr.bf16.mxu0 %v74
    %1885 = vmatmul.mubr.bf16.gmra.mrb[0].mxu0 %v73
    %v1886 = vpop.f32.mrb[0].mxu0
    %v1887 = vadd.f32 %v1844, %v1886
    %v1888 = vpop.f32.mrb[0].mxu0
    %v1889 = vadd.f32 %v1846, %v1888
    %v1890 = vpop.f32.mrb[0].mxu0
    %v1891 = vadd.f32 %v1848, %v1890
    %v1892 = vpop.f32.mrb[0].mxu0
    %v1893 = vadd.f32 %v1850, %v1892
    %1894 = vdwg.mxu0
    %1895 = vmatprep.subr.bf16.mxu0 %v1256
    %1896 = vmatpush1.bf16.msra.mxu0 %v1255
    %1897 = vmatprep.subr.bf16.mxu0 %v1260
    %1898 = vmatpush1.bf16.msra.mxu0 %v1259
    %1899 = vmatprep.subr.bf16.mxu0 %v1264
    %1900 = vmatpush1.bf16.msra.mxu0 %v1263
    %1901 = vmatprep.subr.bf16.mxu0 %v1268
    %1902 = vmatpush1.bf16.msra.mxu0 %v1267
    %1903 = vmatprep.subr.bf16.mxu0 %v1272
    %1904 = vmatpush1.bf16.msra.mxu0 %v1271
    %1905 = vmatprep.subr.bf16.mxu0 %v1276
    %1906 = vmatpush1.bf16.msra.mxu0 %v1275
    %1907 = vmatprep.subr.bf16.mxu0 %v1280
    %1908 = vmatpush1.bf16.msra.mxu0 %v1279
    %1909 = vmatprep.subr.bf16.mxu0 %v1284
    %1910 = vmatpush1.bf16.msra.mxu0 %v1283
    %1911 = vmatprep.subr.bf16.mxu0 %v1288
    %1912 = vmatpush1.bf16.msra.mxu0 %v1287
    %1913 = vmatprep.subr.bf16.mxu0 %v1292
    %1914 = vmatpush1.bf16.msra.mxu0 %v1291
    %1915 = vmatprep.subr.bf16.mxu0 %v1296
    %1916 = vmatpush1.bf16.msra.mxu0 %v1295
    %1917 = vmatprep.subr.bf16.mxu0 %v1300
    %1918 = vmatpush1.bf16.msra.mxu0 %v1299
    %1919 = vmatprep.subr.bf16.mxu0 %v1304
    %1920 = vmatpush1.bf16.msra.mxu0 %v1303
    %1921 = vmatprep.subr.bf16.mxu0 %v1308
    %1922 = vmatpush1.bf16.msra.mxu0 %v1307
    %1923 = vmatprep.subr.bf16.mxu0 %v1312
    %1924 = vmatpush1.bf16.msra.mxu0 %v1311
    %1925 = vmatprep.subr.bf16.mxu0 %v1316
    %1926 = vmatpush1.bf16.msra.mxu0 %v1315
    %1927 = vmatprep.mubr.bf16.mxu0 %v76
    %1928 = vmatmul.mubr.bf16.gmra.mrb[0].mxu0 %v75
    %v1929 = vpop.f32.mrb[0].mxu0
    %v1930 = vadd.f32 %v1887, %v1929
    %v1931 = vpop.f32.mrb[0].mxu0
    %v1932 = vadd.f32 %v1889, %v1931
    %v1933 = vpop.f32.mrb[0].mxu0
    %v1934 = vadd.f32 %v1891, %v1933
    %v1935 = vpop.f32.mrb[0].mxu0
    %v1936 = vadd.f32 %v1893, %v1935
    %1937 = vdwg.mxu0
    %1938 = vmatprep.subr.bf16.mxu0 %v1320
    %1939 = vmatpush1.bf16.msra.mxu0 %v1319
    %1940 = vmatprep.subr.bf16.mxu0 %v1324
    %1941 = vmatpush1.bf16.msra.mxu0 %v1323
    %1942 = vmatprep.subr.bf16.mxu0 %v1328
    %1943 = vmatpush1.bf16.msra.mxu0 %v1327
    %1944 = vmatprep.subr.bf16.mxu0 %v1332
    %1945 = vmatpush1.bf16.msra.mxu0 %v1331
    %1946 = vmatprep.subr.bf16.mxu0 %v1336
    %1947 = vmatpush1.bf16.msra.mxu0 %v1335
    %1948 = vmatprep.subr.bf16.mxu0 %v1340
    %1949 = vmatpush1.bf16.msra.mxu0 %v1339
    %1950 = vmatprep.subr.bf16.mxu0 %v1344
    %1951 = vmatpush1.bf16.msra.mxu0 %v1343
    %1952 = vmatprep.subr.bf16.mxu0 %v1348
    %1953 = vmatpush1.bf16.msra.mxu0 %v1347
    %1954 = vmatprep.subr.bf16.mxu0 %v1352
    %1955 = vmatpush1.bf16.msra.mxu0 %v1351
    %1956 = vmatprep.subr.bf16.mxu0 %v1356
    %1957 = vmatpush1.bf16.msra.mxu0 %v1355
    %1958 = vmatprep.subr.bf16.mxu0 %v1360
    %1959 = vmatpush1.bf16.msra.mxu0 %v1359
    %1960 = vmatprep.subr.bf16.mxu0 %v1364
    %1961 = vmatpush1.bf16.msra.mxu0 %v1363
    %1962 = vmatprep.subr.bf16.mxu0 %v1368
    %1963 = vmatpush1.bf16.msra.mxu0 %v1367
    %1964 = vmatprep.subr.bf16.mxu0 %v1372
    %1965 = vmatpush1.bf16.msra.mxu0 %v1371
    %1966 = vmatprep.subr.bf16.mxu0 %v1376
    %1967 = vmatpush1.bf16.msra.mxu0 %v1375
    %1968 = vmatprep.subr.bf16.mxu0 %v1380
    %1969 = vmatpush1.bf16.msra.mxu0 %v1379
    %1970 = vmatprep.mubr.bf16.mxu0 %v78
    %1971 = vmatmul.mubr.bf16.gmra.mrb[0].mxu0 %v77
    %v1972 = vpop.f32.mrb[0].mxu0
    %v1973 = vadd.f32 %v1930, %v1972
    %v1974 = vpop.f32.mrb[0].mxu0
    %v1975 = vadd.f32 %v1932, %v1974
    %v1976 = vpop.f32.mrb[0].mxu0
    %v1977 = vadd.f32 %v1934, %v1976
    %v1978 = vpop.f32.mrb[0].mxu0
    %v1979 = vadd.f32 %v1936, %v1978
    %1980 = vdwg.mxu0
    %v1981 = vmax.f32 %v1801, 0.0
    %v1982 = vmax.f32 %v1803, 0.0
    %v1983 = vmax.f32 %v1973, 0.0
    %v1984 = vmax.f32 %v1975, 0.0
    %v1985 = vmax.f32 %v1805, 0.0
    %v1986 = vmax.f32 %v1807, 0.0
    %v1987 = vmax.f32 %v1977, 0.0
    %v1988 = vmax.f32 %v1979, 0.0
    %v1989 = vpack.c.bf16 %v1985, %v1981
    %v1990 = vpack.c.bf16 %v1986, %v1982
    %v1991 = vpack.c.bf16 %v1987, %v1983
    %v1992 = vpack.c.bf16 %v1988, %v1984
    %v1993 = vld [vmem:[#allocation5] sm:$0xff]
    %v1994 = vld [vmem:[#allocation5 + $0x8] sm:$0xff]
    %v1995 = vld [vmem:[#allocation5 + $0x10] sm:$0xff]
    %v1996 = vld [vmem:[#allocation5 + $0x18] sm:$0xff]
    %v1997 = vld [vmem:[#allocation5 + $0x20] sm:$0xff]
    %v1998 = vld [vmem:[#allocation5 + $0x28] sm:$0xff]
    %v1999 = vld [vmem:[#allocation5 + $0x30] sm:$0xff]
    %v2000 = vld [vmem:[#allocation5 + $0x38] sm:$0xff]
    %v2001 = vld [vmem:[#allocation5 + $0x40] sm:$0xff]
    %v2002 = vld [vmem:[#allocation5 + $0x48] sm:$0xff]
    %v2003 = vld [vmem:[#allocation5 + $0x50] sm:$0xff]
    %v2004 = vld [vmem:[#allocation5 + $0x58] sm:$0xff]
    %v2005 = vld [vmem:[#allocation5 + $0x60] sm:$0xff]
    %v2006 = vld [vmem:[#allocation5 + $0x68] sm:$0xff]
    %v2007 = vld [vmem:[#allocation5 + $0x70] sm:$0xff]
    %v2008 = vld [vmem:[#allocation5 + $0x78] sm:$0xff]
    %v2009 = vld [vmem:[#allocation5 + $0x80] sm:$0xff]
    %v2010 = vld [vmem:[#allocation5 + $0x88] sm:$0xff]
    %v2011 = vld [vmem:[#allocation5 + $0x90] sm:$0xff]
    %v2012 = vld [vmem:[#allocation5 + $0x98] sm:$0xff]
    %v2013 = vld [vmem:[#allocation5 + $0xa0] sm:$0xff]
    %v2014 = vld [vmem:[#allocation5 + $0xa8] sm:$0xff]
    %v2015 = vld [vmem:[#allocation5 + $0xb0] sm:$0xff]
    %v2016 = vld [vmem:[#allocation5 + $0xb8] sm:$0xff]
    %v2017 = vld [vmem:[#allocation5 + $0xc0] sm:$0xff]
    %v2018 = vld [vmem:[#allocation5 + $0xc8] sm:$0xff]
    %v2019 = vld [vmem:[#allocation5 + $0xd0] sm:$0xff]
    %v2020 = vld [vmem:[#allocation5 + $0xd8] sm:$0xff]
    %v2021 = vld [vmem:[#allocation5 + $0xe0] sm:$0xff]
    %v2022 = vld [vmem:[#allocation5 + $0xe8] sm:$0xff]
    %v2023 = vld [vmem:[#allocation5 + $0xf0] sm:$0xff]
    %v2024 = vld [vmem:[#allocation5 + $0xf8] sm:$0xff]
    %v2025 = vld [vmem:[#allocation5 + $0x100] sm:$0xff]
    %v2026 = vld [vmem:[#allocation5 + $0x108] sm:$0xff]
    %v2027 = vld [vmem:[#allocation5 + $0x110] sm:$0xff]
    %v2028 = vld [vmem:[#allocation5 + $0x118] sm:$0xff]
    %v2029 = vld [vmem:[#allocation5 + $0x120] sm:$0xff]
    %v2030 = vld [vmem:[#allocation5 + $0x128] sm:$0xff]
    %v2031 = vld [vmem:[#allocation5 + $0x130] sm:$0xff]
    %v2032 = vld [vmem:[#allocation5 + $0x138] sm:$0xff]
    %v2033 = vld [vmem:[#allocation5 + $0x140] sm:$0xff]
    %v2034 = vld [vmem:[#allocation5 + $0x148] sm:$0xff]
    %v2035 = vld [vmem:[#allocation5 + $0x150] sm:$0xff]
    %v2036 = vld [vmem:[#allocation5 + $0x158] sm:$0xff]
    %v2037 = vld [vmem:[#allocation5 + $0x160] sm:$0xff]
    %v2038 = vld [vmem:[#allocation5 + $0x168] sm:$0xff]
    %v2039 = vld [vmem:[#allocation5 + $0x170] sm:$0xff]
    %v2040 = vld [vmem:[#allocation5 + $0x178] sm:$0xff]
    %v2041 = vld [vmem:[#allocation5 + $0x180] sm:$0xff]
    %v2042 = vld [vmem:[#allocation5 + $0x188] sm:$0xff]
    %v2043 = vld [vmem:[#allocation5 + $0x190] sm:$0xff]
    %v2044 = vld [vmem:[#allocation5 + $0x198] sm:$0xff]
    %v2045 = vld [vmem:[#allocation5 + $0x1a0] sm:$0xff]
    %v2046 = vld [vmem:[#allocation5 + $0x1a8] sm:$0xff]
    %v2047 = vld [vmem:[#allocation5 + $0x1b0] sm:$0xff]
    %v2048 = vld [vmem:[#allocation5 + $0x1b8] sm:$0xff]
    %v2049 = vld [vmem:[#allocation5 + $0x1c0] sm:$0xff]
    %v2050 = vld [vmem:[#allocation5 + $0x1c8] sm:$0xff]
    %v2051 = vld [vmem:[#allocation5 + $0x1d0] sm:$0xff]
    %v2052 = vld [vmem:[#allocation5 + $0x1d8] sm:$0xff]
    %v2053 = vld [vmem:[#allocation5 + $0x1e0] sm:$0xff]
    %v2054 = vld [vmem:[#allocation5 + $0x1e8] sm:$0xff]
    %v2055 = vld [vmem:[#allocation5 + $0x1f0] sm:$0xff]
    %v2056 = vld [vmem:[#allocation5 + $0x1f8] sm:$0xff]
    %v2057 = vld [vmem:[%s4] sm:$0x3]
    %v2059 = vlaneseq
    %v2060 = vshrl.u32 %v2059, 7
    %v2061 = vsub.s32 0, %v2060
    %v2062 = vrot.slane %v2057, %v2061
    %v2063 = vlaneseq
    %v2064 = vshrl.u32 %v2063, 7
    %v2065 = vsub.s32 1, %v2064
    %v2066 = vrot.slane %v2057, %v2065
    %v2133 = vunpack.c.l.b16 %v1993
    %v2134 = vunpack.c.h.b16 %v1993
    %v2135 = vunpack.c.l.b16 %v1994
    %v2136 = vunpack.c.h.b16 %v1994
    %v2137 = vunpack.c.l.b16 %v1995
    %v2138 = vunpack.c.h.b16 %v1995
    %v2139 = vunpack.c.l.b16 %v1996
    %v2140 = vunpack.c.h.b16 %v1996
    %v2141 = vunpack.c.l.b16 %v1997
    %v2142 = vunpack.c.h.b16 %v1997
    %v2143 = vunpack.c.l.b16 %v1998
    %v2144 = vunpack.c.h.b16 %v1998
    %v2145 = vunpack.c.l.b16 %v1999
    %v2146 = vunpack.c.h.b16 %v1999
    %v2147 = vunpack.c.l.b16 %v2000
    %v2148 = vunpack.c.h.b16 %v2000
    %v2149 = vunpack.c.l.b16 %v2001
    %v2150 = vunpack.c.h.b16 %v2001
    %v2151 = vunpack.c.l.b16 %v2002
    %v2152 = vunpack.c.h.b16 %v2002
    %v2153 = vunpack.c.l.b16 %v2003
    %v2154 = vunpack.c.h.b16 %v2003
    %v2155 = vunpack.c.l.b16 %v2004
    %v2156 = vunpack.c.h.b16 %v2004
    %v2157 = vunpack.c.l.b16 %v2005
    %v2158 = vunpack.c.h.b16 %v2005
    %v2159 = vunpack.c.l.b16 %v2006
    %v2160 = vunpack.c.h.b16 %v2006
    %v2161 = vunpack.c.l.b16 %v2007
    %v2162 = vunpack.c.h.b16 %v2007
    %v2163 = vunpack.c.l.b16 %v2008
    %v2164 = vunpack.c.h.b16 %v2008
    %v2165 = vunpack.c.l.b16 %v2009
    %v2166 = vunpack.c.h.b16 %v2009
    %v2167 = vunpack.c.l.b16 %v2010
    %v2168 = vunpack.c.h.b16 %v2010
    %v2169 = vunpack.c.l.b16 %v2011
    %v2170 = vunpack.c.h.b16 %v2011
    %v2171 = vunpack.c.l.b16 %v2012
    %v2172 = vunpack.c.h.b16 %v2012
    %v2173 = vunpack.c.l.b16 %v2013
    %v2174 = vunpack.c.h.b16 %v2013
    %v2175 = vunpack.c.l.b16 %v2014
    %v2176 = vunpack.c.h.b16 %v2014
    %v2177 = vunpack.c.l.b16 %v2015
    %v2178 = vunpack.c.h.b16 %v2015
    %v2179 = vunpack.c.l.b16 %v2016
    %v2180 = vunpack.c.h.b16 %v2016
    %v2181 = vunpack.c.l.b16 %v2017
    %v2182 = vunpack.c.h.b16 %v2017
    %v2183 = vunpack.c.l.b16 %v2018
    %v2184 = vunpack.c.h.b16 %v2018
    %v2185 = vunpack.c.l.b16 %v2019
    %v2186 = vunpack.c.h.b16 %v2019
    %v2187 = vunpack.c.l.b16 %v2020
    %v2188 = vunpack.c.h.b16 %v2020
    %v2189 = vunpack.c.l.b16 %v2021
    %v2190 = vunpack.c.h.b16 %v2021
    %v2191 = vunpack.c.l.b16 %v2022
    %v2192 = vunpack.c.h.b16 %v2022
    %v2193 = vunpack.c.l.b16 %v2023
    %v2194 = vunpack.c.h.b16 %v2023
    %v2195 = vunpack.c.l.b16 %v2024
    %v2196 = vunpack.c.h.b16 %v2024
    %v2197 = vunpack.c.l.b16 %v2025
    %v2198 = vunpack.c.h.b16 %v2025
    %v2199 = vunpack.c.l.b16 %v2026
    %v2200 = vunpack.c.h.b16 %v2026
    %v2201 = vunpack.c.l.b16 %v2027
    %v2202 = vunpack.c.h.b16 %v2027
    %v2203 = vunpack.c.l.b16 %v2028
    %v2204 = vunpack.c.h.b16 %v2028
    %v2205 = vunpack.c.l.b16 %v2029
    %v2206 = vunpack.c.h.b16 %v2029
    %v2207 = vunpack.c.l.b16 %v2030
    %v2208 = vunpack.c.h.b16 %v2030
    %v2209 = vunpack.c.l.b16 %v2031
    %v2210 = vunpack.c.h.b16 %v2031
    %v2211 = vunpack.c.l.b16 %v2032
    %v2212 = vunpack.c.h.b16 %v2032
    %v2213 = vunpack.c.l.b16 %v2033
    %v2214 = vunpack.c.h.b16 %v2033
    %v2215 = vunpack.c.l.b16 %v2034
    %v2216 = vunpack.c.h.b16 %v2034
    %v2217 = vunpack.c.l.b16 %v2035
    %v2218 = vunpack.c.h.b16 %v2035
    %v2219 = vunpack.c.l.b16 %v2036
    %v2220 = vunpack.c.h.b16 %v2036
    %v2221 = vunpack.c.l.b16 %v2037
    %v2222 = vunpack.c.h.b16 %v2037
    %v2223 = vunpack.c.l.b16 %v2038
    %v2224 = vunpack.c.h.b16 %v2038
    %v2225 = vunpack.c.l.b16 %v2039
    %v2226 = vunpack.c.h.b16 %v2039
    %v2227 = vunpack.c.l.b16 %v2040
    %v2228 = vunpack.c.h.b16 %v2040
    %v2229 = vunpack.c.l.b16 %v2041
    %v2230 = vunpack.c.h.b16 %v2041
    %v2231 = vunpack.c.l.b16 %v2042
    %v2232 = vunpack.c.h.b16 %v2042
    %v2233 = vunpack.c.l.b16 %v2043
    %v2234 = vunpack.c.h.b16 %v2043
    %v2235 = vunpack.c.l.b16 %v2044
    %v2236 = vunpack.c.h.b16 %v2044
    %v2237 = vunpack.c.l.b16 %v2045
    %v2238 = vunpack.c.h.b16 %v2045
    %v2239 = vunpack.c.l.b16 %v2046
    %v2240 = vunpack.c.h.b16 %v2046
    %v2241 = vunpack.c.l.b16 %v2047
    %v2242 = vunpack.c.h.b16 %v2047
    %v2243 = vunpack.c.l.b16 %v2048
    %v2244 = vunpack.c.h.b16 %v2048
    %v2245 = vunpack.c.l.b16 %v2049
    %v2246 = vunpack.c.h.b16 %v2049
    %v2247 = vunpack.c.l.b16 %v2050
    %v2248 = vunpack.c.h.b16 %v2050
    %v2249 = vunpack.c.l.b16 %v2051
    %v2250 = vunpack.c.h.b16 %v2051
    %v2251 = vunpack.c.l.b16 %v2052
    %v2252 = vunpack.c.h.b16 %v2052
    %v2253 = vunpack.c.l.b16 %v2053
    %v2254 = vunpack.c.h.b16 %v2053
    %v2255 = vunpack.c.l.b16 %v2054
    %v2256 = vunpack.c.h.b16 %v2054
    %v2257 = vunpack.c.l.b16 %v2055
    %v2258 = vunpack.c.h.b16 %v2055
    %v2259 = vunpack.c.l.b16 %v2056
    %v2260 = vunpack.c.h.b16 %v2056
    %v2261 = vpack.c.b16 %v2135, %v2133
    %v2262 = vpack.c.b16 %v2136, %v2134
    %v2263 = vpack.c.b16 %v2139, %v2137
    %v2264 = vpack.c.b16 %v2140, %v2138
    %v2265 = vpack.c.b16 %v2143, %v2141
    %v2266 = vpack.c.b16 %v2144, %v2142
    %v2267 = vpack.c.b16 %v2147, %v2145
    %v2268 = vpack.c.b16 %v2148, %v2146
    %v2269 = vpack.c.b16 %v2151, %v2149
    %v2270 = vpack.c.b16 %v2152, %v2150
    %v2271 = vpack.c.b16 %v2155, %v2153
    %v2272 = vpack.c.b16 %v2156, %v2154
    %v2273 = vpack.c.b16 %v2159, %v2157
    %v2274 = vpack.c.b16 %v2160, %v2158
    %v2275 = vpack.c.b16 %v2163, %v2161
    %v2276 = vpack.c.b16 %v2164, %v2162
    %v2277 = vpack.c.b16 %v2167, %v2165
    %v2278 = vpack.c.b16 %v2168, %v2166
    %v2279 = vpack.c.b16 %v2171, %v2169
    %v2280 = vpack.c.b16 %v2172, %v2170
    %v2281 = vpack.c.b16 %v2175, %v2173
    %v2282 = vpack.c.b16 %v2176, %v2174
    %v2283 = vpack.c.b16 %v2179, %v2177
    %v2284 = vpack.c.b16 %v2180, %v2178
    %v2285 = vpack.c.b16 %v2183, %v2181
    %v2286 = vpack.c.b16 %v2184, %v2182
    %v2287 = vpack.c.b16 %v2187, %v2185
    %v2288 = vpack.c.b16 %v2188, %v2186
    %v2289 = vpack.c.b16 %v2191, %v2189
    %v2290 = vpack.c.b16 %v2192, %v2190
    %v2291 = vpack.c.b16 %v2195, %v2193
    %v2292 = vpack.c.b16 %v2196, %v2194
    %v2293 = vpack.c.b16 %v2199, %v2197
    %v2294 = vpack.c.b16 %v2200, %v2198
    %v2295 = vpack.c.b16 %v2203, %v2201
    %v2296 = vpack.c.b16 %v2204, %v2202
    %v2297 = vpack.c.b16 %v2207, %v2205
    %v2298 = vpack.c.b16 %v2208, %v2206
    %v2299 = vpack.c.b16 %v2211, %v2209
    %v2300 = vpack.c.b16 %v2212, %v2210
    %v2301 = vpack.c.b16 %v2215, %v2213
    %v2302 = vpack.c.b16 %v2216, %v2214
    %v2303 = vpack.c.b16 %v2219, %v2217
    %v2304 = vpack.c.b16 %v2220, %v2218
    %v2305 = vpack.c.b16 %v2223, %v2221
    %v2306 = vpack.c.b16 %v2224, %v2222
    %v2307 = vpack.c.b16 %v2227, %v2225
    %v2308 = vpack.c.b16 %v2228, %v2226
    %v2309 = vpack.c.b16 %v2231, %v2229
    %v2310 = vpack.c.b16 %v2232, %v2230
    %v2311 = vpack.c.b16 %v2235, %v2233
    %v2312 = vpack.c.b16 %v2236, %v2234
    %v2313 = vpack.c.b16 %v2239, %v2237
    %v2314 = vpack.c.b16 %v2240, %v2238
    %v2315 = vpack.c.b16 %v2243, %v2241
    %v2316 = vpack.c.b16 %v2244, %v2242
    %v2317 = vpack.c.b16 %v2247, %v2245
    %v2318 = vpack.c.b16 %v2248, %v2246
    %v2319 = vpack.c.b16 %v2251, %v2249
    %v2320 = vpack.c.b16 %v2252, %v2250
    %v2321 = vpack.c.b16 %v2255, %v2253
    %v2322 = vpack.c.b16 %v2256, %v2254
    %v2323 = vpack.c.b16 %v2259, %v2257
    %v2324 = vpack.c.b16 %v2260, %v2258
    %2389 = vmatprep.subr.bf16.mxu0 %v2262
    %2390 = vmatpush1.bf16.msra.mxu0 %v2261
    %2391 = vmatprep.subr.bf16.mxu0 %v2264
    %2392 = vmatpush1.bf16.msra.mxu0 %v2263
    %2393 = vmatprep.subr.bf16.mxu0 %v2266
    %2394 = vmatpush1.bf16.msra.mxu0 %v2265
    %2395 = vmatprep.subr.bf16.mxu0 %v2268
    %2396 = vmatpush1.bf16.msra.mxu0 %v2267
    %2397 = vmatprep.subr.bf16.mxu0 %v2270
    %2398 = vmatpush1.bf16.msra.mxu0 %v2269
    %2399 = vmatprep.subr.bf16.mxu0 %v2272
    %2400 = vmatpush1.bf16.msra.mxu0 %v2271
    %2401 = vmatprep.subr.bf16.mxu0 %v2274
    %2402 = vmatpush1.bf16.msra.mxu0 %v2273
    %2403 = vmatprep.subr.bf16.mxu0 %v2276
    %2404 = vmatpush1.bf16.msra.mxu0 %v2275
    %2405 = vmatprep.subr.bf16.mxu0 %v2278
    %2406 = vmatpush1.bf16.msra.mxu0 %v2277
    %2407 = vmatprep.subr.bf16.mxu0 %v2280
    %2408 = vmatpush1.bf16.msra.mxu0 %v2279
    %2409 = vmatprep.subr.bf16.mxu0 %v2282
    %2410 = vmatpush1.bf16.msra.mxu0 %v2281
    %2411 = vmatprep.subr.bf16.mxu0 %v2284
    %2412 = vmatpush1.bf16.msra.mxu0 %v2283
    %2413 = vmatprep.subr.bf16.mxu0 %v2286
    %2414 = vmatpush1.bf16.msra.mxu0 %v2285
    %2415 = vmatprep.subr.bf16.mxu0 %v2288
    %2416 = vmatpush1.bf16.msra.mxu0 %v2287
    %2417 = vmatprep.subr.bf16.mxu0 %v2290
    %2418 = vmatpush1.bf16.msra.mxu0 %v2289
    %2419 = vmatprep.subr.bf16.mxu0 %v2292
    %2420 = vmatpush1.bf16.msra.mxu0 %v2291
    %2421 = vmatprep.mubr.bf16.mxu0 %v1990
    %2422 = vmatmul.mubr.bf16.gmra.mrb[0].mxu0 %v1989
    %v2423 = vpop.f32.mrb[0].mxu0
    %v2424 = vadd.f32 %v2062, %v2423
    %v2425 = vpop.f32.mrb[0].mxu0
    %v2426 = vadd.f32 %v2066, %v2425
    %v2427 = vpop.f32.mrb[0].mxu0
    %v2428 = vadd.f32 %v2062, %v2427
    %v2429 = vpop.f32.mrb[0].mxu0
    %v2430 = vadd.f32 %v2066, %v2429
    %2431 = vdwg.mxu0
    %2432 = vmatprep.subr.bf16.mxu0 %v2294
    %2433 = vmatpush1.bf16.msra.mxu0 %v2293
    %2434 = vmatprep.subr.bf16.mxu0 %v2296
    %2435 = vmatpush1.bf16.msra.mxu0 %v2295
    %2436 = vmatprep.subr.bf16.mxu0 %v2298
    %2437 = vmatpush1.bf16.msra.mxu0 %v2297
    %2438 = vmatprep.subr.bf16.mxu0 %v2300
    %2439 = vmatpush1.bf16.msra.mxu0 %v2299
    %2440 = vmatprep.subr.bf16.mxu0 %v2302
    %2441 = vmatpush1.bf16.msra.mxu0 %v2301
    %2442 = vmatprep.subr.bf16.mxu0 %v2304
    %2443 = vmatpush1.bf16.msra.mxu0 %v2303
    %2444 = vmatprep.subr.bf16.mxu0 %v2306
    %2445 = vmatpush1.bf16.msra.mxu0 %v2305
    %2446 = vmatprep.subr.bf16.mxu0 %v2308
    %2447 = vmatpush1.bf16.msra.mxu0 %v2307
    %2448 = vmatprep.subr.bf16.mxu0 %v2310
    %2449 = vmatpush1.bf16.msra.mxu0 %v2309
    %2450 = vmatprep.subr.bf16.mxu0 %v2312
    %2451 = vmatpush1.bf16.msra.mxu0 %v2311
    %2452 = vmatprep.subr.bf16.mxu0 %v2314
    %2453 = vmatpush1.bf16.msra.mxu0 %v2313
    %2454 = vmatprep.subr.bf16.mxu0 %v2316
    %2455 = vmatpush1.bf16.msra.mxu0 %v2315
    %2456 = vmatprep.subr.bf16.mxu0 %v2318
    %2457 = vmatpush1.bf16.msra.mxu0 %v2317
    %2458 = vmatprep.subr.bf16.mxu0 %v2320
    %2459 = vmatpush1.bf16.msra.mxu0 %v2319
    %2460 = vmatprep.subr.bf16.mxu0 %v2322
    %2461 = vmatpush1.bf16.msra.mxu0 %v2321
    %2462 = vmatprep.subr.bf16.mxu0 %v2324
    %2463 = vmatpush1.bf16.msra.mxu0 %v2323
    %2464 = vmatprep.mubr.bf16.mxu0 %v1992
    %2465 = vmatmul.mubr.bf16.gmra.mrb[0].mxu0 %v1991
    %v2466 = vpop.f32.mrb[0].mxu0
    %v2467 = vadd.f32 %v2424, %v2466
    %v2468 = vpop.f32.mrb[0].mxu0
    %v2469 = vadd.f32 %v2426, %v2468
    %v2470 = vpop.f32.mrb[0].mxu0
    %v2471 = vadd.f32 %v2428, %v2470
    %v2472 = vpop.f32.mrb[0].mxu0
    %v2473 = vadd.f32 %v2430, %v2472
    %2474 = vdwg.mxu0
    %v2475 = vmax.f32 %v2467, 0.0
    %v2476 = vmax.f32 %v2469, 0.0
    %v2477 = vmax.f32 %v2471, 0.0
    %v2478 = vmax.f32 %v2473, 0.0
    %v2479 = vld [vmem:[%s5] sm:$0x3]
    %v2481 = vlaneseq
    %v2482 = vshrl.u32 %v2481, 7
    %v2483 = vsub.s32 0, %v2482
    %v2484 = vrot.slane %v2479, %v2483
    %v2485 = vlaneseq
    %v2486 = vshrl.u32 %v2485, 7
    %v2487 = vsub.s32 1, %v2486
    %v2488 = vrot.slane %v2479, %v2487
    %v2491 = vmul.f32 %v2475, %v2484
    %v2492 = vmul.f32 %v2476, %v2488
    %v2493 = vmul.f32 %v2477, %v2484
    %v2494 = vmul.f32 %v2478, %v2488
    %v2495 = vadd.f32 %v2491, %v2492
    %2496 = vadd.xlane.f32.xlu0 %v2495
    %v2497 = vpop.xlane.xlu0 %2496
    %v2498 = vadd.f32 %v2493, %v2494
    %2499 = vadd.xlane.f32.xlu0 %v2498
    %v2500 = vpop.xlane.xlu0 %2499
    %s2501 = sld [smem:[#allocation2]]
    %v2502 = vstv %s2501
    %v2503 = vadd.f32 %v2497, %v2502
    %v2504 = vadd.f32 %v2500, %v2502
    %v2505 = vsub.f32 %v2503, %v2503
    %v2506 = vsub.f32 %v2504, %v2504
    %v2507 = vmul.f32 %v2505, 1.442695
    %v2508 = vpow.pop %v2507
    %v2509 = vmul.f32 %v2506, 1.442695
    %v2510 = vpow.pop %v2509
    %v2513 = vlaneseq
    %v2514 = vand.u32 %v2513, 127
    %v2515 = vlaneseq
    %v2516 = vshrl.u32 %v2515, 7
    %v2517 = vsub.s32 %v2514, %v2516
    %v2518 = vrot.slane %v2508, %v2517
    %v2519 = vadd.s32 %v2514, 4294967288
    %v2520 = vlaneseq
    %v2521 = vshrl.u32 %v2520, 7
    %v2522 = vsub.s32 %v2519, %v2521
    %v2523 = vrot.slane %v2510, %v2522
    %vm2524 = vcmask 130112
    %v2525 = vsel %vm2524, %v2523, %v2518
    %vm2527 = vcmask 122880
    %2528 = vst.msk [vmem:[%s7] sm:$0x1] %vm2527, %v2525
    // Predicated region
    $region38: #{ann_forward.1} parent=1 // pred_check
      _
    $region39: #{ann_forward.1} parent=1 // pred_check_branch
      %2530 = sbr.rel (0) target = $region41
    $region40: #{ann_forward.1} parent=1 // pred_region
      _
    $region41: #{ann_forward.1} parent=1 // pred_fallthru
      _
    // Predicated region
    $region42: #{ann_forward.1} parent=1 // pred_check
      _
    $region43: #{ann_forward.1} parent=1 // pred_check_branch
      %2532 = sbr.rel (0) target = $region45
    $region44: #{ann_forward.1} parent=1 // pred_region
      _
    $region45: #{ann_forward.1} parent=1 // pred_fallthru
      _
    %2533 = vsyncpa [#allocation4], 1
    %2534 = vsyncpa [#allocation6], 1

</llo_original>
